<compile_context>
chip_gen: v5e
topology: v5e:2x2
jax: 0.10.0
libtpu: 0.0.40
codegen_flags: <defaults>
</compile_context>

<pallas_src>
import functools

import jax
import jax.numpy as jnp
import numpy as np
from jax import lax
from jax.experimental import pallas as pl
from jax.experimental.pallas import tpu as pltpu


def _round_up(x, m):
    return ((x + m - 1) // m) * m


def _gru_recurrence_kernel(gi_ref, whh_ref, bhh_ref, out_ref, h_ref):
    """One grid step == T timesteps of the GRU recurrence.

    gi_ref : (T, 3, Bp, Hp)  precomputed input-side gate activations (r, z, n)
    whh_ref: (3, Hp, Hp)     hidden->gate weights, leading gate axis
    bhh_ref: (3, 1, Hp)      hidden->gate biases,  leading gate axis
    out_ref: (T, Bp, Hp)     per-timestep hidden outputs (lane-dense, Hp % 128 == 0)
    h_ref  : (Bp, Hp)        carried hidden state (VMEM scratch, persists across grid)
    """
    step = pl.program_id(0)

    @pl.when(step == 0)
    def _():
        h_ref[...] = jnp.zeros_like(h_ref)

    T = gi_ref.shape[0]  # static

    def body(t, carry):
        h_prev = h_ref[...]                                   # (Bp, Hp)
        gi_t = gi_ref[t]                                      # (3, Bp, Hp)

        # Only serial matmuls left on the critical path: h_prev @ W_hh per gate.
        h_r = jnp.dot(h_prev, whh_ref[0],
                      preferred_element_type=jnp.float32) + bhh_ref[0]
        h_z = jnp.dot(h_prev, whh_ref[1],
                      preferred_element_type=jnp.float32) + bhh_ref[1]
        h_n = jnp.dot(h_prev, whh_ref[2],
                      preferred_element_type=jnp.float32) + bhh_ref[2]

        # PyTorch GRU gate math (r, z, n ordering), f32 on VPU/EUP.
        r = jax.nn.sigmoid(gi_t[0] + h_r)
        z = jax.nn.sigmoid(gi_t[1] + h_z)
        n = jnp.tanh(gi_t[2] + r * h_n)
        h_new = (1.0 - z) * n + z * h_prev

        h_ref[...] = h_new
        out_ref[t] = h_new.astype(out_ref.dtype)
        return carry

    lax.fori_loop(0, T, body, 0, unroll=True)


def encoder_rnn_forward(x, params, *, time_tile=4):
    """x: (B, S, F) float32. Returns (output (B, S, H), hidden_state (1, B, H))."""
    wc, bc, wih, bih, whh, bhh = params
    B, S, F = x.shape
    H = wc.shape[1]

    Bp = _round_up(B, 8)          # sublane-dense batch
    Hp = _round_up(H, 128)        # lane-dense hidden
    T = max(1, min(time_tile, S))  # timesteps per grid step
    Sp = _round_up(S, T)

    # ---- hoisted, folded input projection (one big parallel MXU GEMM) ----
    # Dropout is identity in eval mode, so compress + input projection fold.
    wfold = wc @ wih                        # (F, 3H)
    bfold = bc @ wih + bih                  # (1, 3H)
    gi = x.reshape(B * S, F).astype(jnp.float32) @ wfold + bfold    # (B*S, 3H)
    gi = gi.reshape(B, S, 3, H).transpose(1, 2, 0, 3)               # (S, 3, B, H)
    gi = jnp.pad(gi, ((0, Sp - S), (0, 0), (0, Bp - B), (0, Hp - H)))

    # Recurrent weights/biases with a leading gate axis, zero-padded so the
    # padded hidden columns stay exactly 0 through the recurrence.
    whh_g = jnp.pad(whh.reshape(H, 3, H).transpose(1, 0, 2),
                    ((0, 0), (0, Hp - H), (0, Hp - H)))             # (3, Hp, Hp)
    bhh_g = jnp.pad(bhh.reshape(1, 3, H).transpose(1, 0, 2),
                    ((0, 0), (0, 0), (0, Hp - H)))                  # (3, 1, Hp)

    out_tm = pl.pallas_call(
        _gru_recurrence_kernel,
        out_shape=jax.ShapeDtypeStruct((Sp, Bp, Hp), jnp.float32),
        grid_spec=pltpu.PrefetchScalarGridSpec(
            num_scalar_prefetch=0,
            grid=(Sp // T,),
            in_specs=[
                pl.BlockSpec((T, 3, Bp, Hp), lambda s: (s, 0, 0, 0)),  # gi tile
                pl.BlockSpec((3, Hp, Hp), lambda s: (0, 0, 0)),        # W_hh
                pl.BlockSpec((3, 1, Hp), lambda s: (0, 0, 0)),         # b_hh
            ],
            out_specs=pl.BlockSpec((T, Bp, Hp), lambda s: (s, 0, 0)),
            scratch_shapes=[pltpu.VMEM((Bp, Hp), jnp.float32)],        # carried h_t
        ),
        compiler_params=pltpu.CompilerParams(
            dimension_semantics=("arbitrary",),      # time recurrence is sequential
            vmem_limit_bytes=64 * 1024 * 1024,
        ),
    )(gi, whh_g, bhh_g)

    # Slice off padding; module contract is batch_first output + (1, B, H) hidden.
    output = jnp.transpose(out_tm[:S, :B, :H], (1, 0, 2))    # (B, S, H)
    hidden_state = out_tm[S - 1:S, :B, :H]                   # (1, B, H)
    return output, hidden_state


def _reference_forward(x, params):
    """Pure-JAX reference (same math as PyTorch eval-mode encoderRNN)."""
    wc, bc, wih, bih, whh, bhh = params
    B, S, F = x.shape
    H = wc.shape[1]
    c = x.reshape(-1, F) @ wc + bc
    c = c.reshape(B, S, H)

    def step(h, x_t):
        gi = x_t @ wih + bih
        gh = h @ whh + bhh
        i_r, i_z, i_n = gi[:, :H], gi[:, H:2 * H], gi[:, 2 * H:]
        h_r, h_z, h_n = gh[:, :H], gh[:, H:2 * H], gh[:, 2 * H:]
        r = jax.nn.sigmoid(i_r + h_r)
        z = jax.nn.sigmoid(i_z + h_z)
        n = jnp.tanh(i_n + r * h_n)
        h_new = (1.0 - z) * n + z * h
        return h_new, h_new

    h0 = jnp.zeros((B, H), jnp.float32)
    h_last, outs = lax.scan(step, h0, jnp.transpose(c, (1, 0, 2)))
    return jnp.transpose(outs, (1, 0, 2)), h_last[None]


def init_params(key, input_size, hidden_size):
    ks = jax.random.split(key, 6)
    scale_c = 1.0 / np.sqrt(input_size)
    scale_h = 1.0 / np.sqrt(hidden_size)
    wc = jax.random.uniform(ks[0], (input_size, hidden_size),
                            jnp.float32, -scale_c, scale_c)
    bc = jax.random.uniform(ks[1], (1, hidden_size),
                            jnp.float32, -scale_c, scale_c)
    wih = jax.random.uniform(ks[2], (hidden_size, 3 * hidden_size),
                             jnp.float32, -scale_h, scale_h)
    bih = jax.random.uniform(ks[3], (1, 3 * hidden_size),
                             jnp.float32, -scale_h, scale_h)
    whh = jax.random.uniform(ks[4], (hidden_size, 3 * hidden_size),
                             jnp.float32, -scale_h, scale_h)
    bhh = jax.random.uniform(ks[5], (1, 3 * hidden_size),
                             jnp.float32, -scale_h, scale_h)
    return (wc, bc, wih, bih, whh, bhh)


if __name__ == "__main__":
    key = jax.random.PRNGKey(0)
    k_x, k_p = jax.random.split(key)

    B, S, F, H = 2, 8, 16, 32        # batch, seq_len, input_size, hidden_size
    x = jax.random.normal(k_x, (B, S, F), jnp.float32)
    params = init_params(k_p, F, H)

    # TODO(synk): training-mode Dropout (RNG masking) and a user-supplied
    # initial hidden state are not implemented; this matches eval-mode
    # nn.GRU defaults (dropout = identity, h0 = 0).
    fwd = jax.jit(functools.partial(encoder_rnn_forward, time_tile=4))
    output, hidden_state = fwd(x, params)
    jax.block_until_ready((output, hidden_state))

    ref_out, ref_h = _reference_forward(x, params)
    assert output.shape == (B, S, H) and hidden_state.shape == (1, B, H)
    np.testing.assert_allclose(np.asarray(output), np.asarray(ref_out),
                               rtol=1e-4, atol=1e-4)
    np.testing.assert_allclose(np.asarray(hidden_state), np.asarray(ref_h),
                               rtol=1e-4, atol=1e-4)

    print("KERNEL_OK")
</pallas_src>

<mosaic_0001>
module attributes {stable_mosaic.version = 11 : i64} {
  func.func @_gru_recurrence_kernel(%arg0: i32, %arg1: memref<4x3x8x128xf32, #tpu.memory_space<vmem>>, %arg2: memref<3x128x128xf32, #tpu.memory_space<vmem>>, %arg3: memref<3x1x128xf32, #tpu.memory_space<vmem>>, %arg4: memref<4x8x128xf32, #tpu.memory_space<vmem>>, %arg5: memref<8x128xf32, #tpu.memory_space<vmem>>) attributes {dimension_semantics = [#tpu.dimension_semantics<arbitrary>], iteration_bounds = array<i64: 2>, scalar_prefetch = 0 : i64, scratch_operands = 1 : i64, tpu.core_type = #tpu.core_type<tc>, window_params = [{transform_indices = @transform_0, window_bounds = array<i64: 4, 3, 8, 128>}, {pipeline_mode = #tpu.pipeline_mode<synchronous>, transform_indices = @transform_1, window_bounds = array<i64: 3, 128, 128>}, {pipeline_mode = #tpu.pipeline_mode<synchronous>, transform_indices = @transform_2, window_bounds = array<i64: 3, 1, 128>}, {transform_indices = @transform_3, window_bounds = array<i64: 4, 8, 128>}]} {
    %c0_i32 = arith.constant 0 : i32
    %0 = arith.cmpi eq, %arg0, %c0_i32 : i32
    %1 = arith.extui %0 : i1 to i32
    %c0_i32_0 = arith.constant 0 : i32
    %2 = arith.cmpi ne, %1, %c0_i32_0 : i32
    scf.if %2 {
      %cst_130 = arith.constant 0.000000e+00 : f32
      %227 = vector.broadcast %cst_130 : f32 to vector<8x128xf32>
      %c0_131 = arith.constant 0 : index
      %c0_132 = arith.constant 0 : index
      %228 = vector.load %arg5[%c0_131, %c0_132] : memref<8x128xf32, #tpu.memory_space<vmem>>, vector<8x128xf32>
      tpu.vector_store %arg5[%c0_131, %c0_132], %227 {strides = array<i32>} : memref<8x128xf32, #tpu.memory_space<vmem>>, vector<8x128xf32>,
    } else {
    }
    %c0_i32_1 = arith.constant 0 : i32
    %c0 = arith.constant 0 : index
    %c0_2 = arith.constant 0 : index
    %3 = vector.load %arg5[%c0, %c0_2] : memref<8x128xf32, #tpu.memory_space<vmem>>, vector<8x128xf32>
    %4 = arith.index_cast %c0_i32_1 : i32 to index
    %c0_3 = arith.constant 0 : index
    %c0_4 = arith.constant 0 : index
    %c0_5 = arith.constant 0 : index
    %5 = vector.load %arg1[%4, %c0_3, %c0_4, %c0_5] : memref<4x3x8x128xf32, #tpu.memory_space<vmem>>, vector<1x3x8x128xf32>
    %6 = vector.shape_cast %5 : vector<1x3x8x128xf32> to vector<3x8x128xf32>
    %c0_6 = arith.constant 0 : index
    %c0_7 = arith.constant 0 : index
    %c0_8 = arith.constant 0 : index
    %7 = vector.load %arg2[%c0_6, %c0_7, %c0_8] : memref<3x128x128xf32, #tpu.memory_space<vmem>>, vector<1x128x128xf32>
    %8 = vector.shape_cast %7 : vector<1x128x128xf32> to vector<128x128xf32>
    %cst = arith.constant dense<0.000000e+00> : vector<8x128xf32>
    %9 = tpu.matmul %3, %8, %cst {dimension_numbers = #tpu.dot_dimension_numbers<[1], [0], [0], [1], [0, 0, 1, 1], [], []>} : vector<8x128xf32>, vector<128x128xf32>, vector<8x128xf32> -> vector<8x128xf32>
    %c0_9 = arith.constant 0 : index
    %c0_10 = arith.constant 0 : index
    %c0_11 = arith.constant 0 : index
    %10 = vector.load %arg3[%c0_9, %c0_10, %c0_11] : memref<3x1x128xf32, #tpu.memory_space<vmem>>, vector<1x1x128xf32>
    %11 = vector.shape_cast %10 : vector<1x1x128xf32> to vector<1x128xf32>
    %12 = vector.broadcast %11 : vector<1x128xf32> to vector<8x128xf32>
    %13 = arith.addf %9, %12 : vector<8x128xf32>
    %c1 = arith.constant 1 : index
    %c0_12 = arith.constant 0 : index
    %c0_13 = arith.constant 0 : index
    %14 = vector.load %arg2[%c1, %c0_12, %c0_13] : memref<3x128x128xf32, #tpu.memory_space<vmem>>, vector<1x128x128xf32>
    %15 = vector.shape_cast %14 : vector<1x128x128xf32> to vector<128x128xf32>
    %cst_14 = arith.constant dense<0.000000e+00> : vector<8x128xf32>
    %16 = tpu.matmul %3, %15, %cst_14 {dimension_numbers = #tpu.dot_dimension_numbers<[1], [0], [0], [1], [0, 0, 1, 1], [], []>} : vector<8x128xf32>, vector<128x128xf32>, vector<8x128xf32> -> vector<8x128xf32>
    %c1_15 = arith.constant 1 : index
    %c0_16 = arith.constant 0 : index
    %c0_17 = arith.constant 0 : index
    %17 = vector.load %arg3[%c1_15, %c0_16, %c0_17] : memref<3x1x128xf32, #tpu.memory_space<vmem>>, vector<1x1x128xf32>
    %18 = vector.shape_cast %17 : vector<1x1x128xf32> to vector<1x128xf32>
    %19 = vector.broadcast %18 : vector<1x128xf32> to vector<8x128xf32>
    %20 = arith.addf %16, %19 : vector<8x128xf32>
    %c2 = arith.constant 2 : index
    %c0_18 = arith.constant 0 : index
    %c0_19 = arith.constant 0 : index
    %21 = vector.load %arg2[%c2, %c0_18, %c0_19] : memref<3x128x128xf32, #tpu.memory_space<vmem>>, vector<1x128x128xf32>
    %22 = vector.shape_cast %21 : vector<1x128x128xf32> to vector<128x128xf32>
    %cst_20 = arith.constant dense<0.000000e+00> : vector<8x128xf32>
    %23 = tpu.matmul %3, %22, %cst_20 {dimension_numbers = #tpu.dot_dimension_numbers<[1], [0], [0], [1], [0, 0, 1, 1], [], []>} : vector<8x128xf32>, vector<128x128xf32>, vector<8x128xf32> -> vector<8x128xf32>
    %c2_21 = arith.constant 2 : index
    %c0_22 = arith.constant 0 : index
    %c0_23 = arith.constant 0 : index
    %24 = vector.load %arg3[%c2_21, %c0_22, %c0_23] : memref<3x1x128xf32, #tpu.memory_space<vmem>>, vector<1x1x128xf32>
    %25 = vector.shape_cast %24 : vector<1x1x128xf32> to vector<1x128xf32>
    %26 = vector.broadcast %25 : vector<1x128xf32> to vector<8x128xf32>
    %27 = arith.addf %23, %26 : vector<8x128xf32>
    %28 = vector.extract_strided_slice %6 {offsets = [0, 0, 0], sizes = [1, 8, 128], strides = [1, 1, 1]} : vector<3x8x128xf32> to vector<1x8x128xf32>
    %29 = vector.shape_cast %28 : vector<1x8x128xf32> to vector<8x128xf32>
    %30 = arith.addf %29, %13 : vector<8x128xf32>
    %31 = arith.negf %30 : vector<8x128xf32>
    %32 = math.exp %31 : vector<8x128xf32>
    %cst_24 = arith.constant 1.000000e+00 : f32
    %33 = vector.broadcast %cst_24 : f32 to vector<8x128xf32>
    %34 = arith.addf %33, %32 : vector<8x128xf32>
    %35 = arith.divf %33, %34 : vector<8x128xf32>
    %36 = vector.extract_strided_slice %6 {offsets = [1, 0, 0], sizes = [1, 8, 128], strides = [1, 1, 1]} : vector<3x8x128xf32> to vector<1x8x128xf32>
    %37 = vector.shape_cast %36 : vector<1x8x128xf32> to vector<8x128xf32>
    %38 = arith.addf %37, %20 : vector<8x128xf32>
    %39 = arith.negf %38 : vector<8x128xf32>
    %40 = math.exp %39 : vector<8x128xf32>
    %cst_25 = arith.constant 1.000000e+00 : f32
    %41 = vector.broadcast %cst_25 : f32 to vector<8x128xf32>
    %42 = arith.addf %41, %40 : vector<8x128xf32>
    %43 = arith.divf %41, %42 : vector<8x128xf32>
    %44 = vector.extract_strided_slice %6 {offsets = [2, 0, 0], sizes = [1, 8, 128], strides = [1, 1, 1]} : vector<3x8x128xf32> to vector<1x8x128xf32>
    %45 = vector.shape_cast %44 : vector<1x8x128xf32> to vector<8x128xf32>
    %46 = arith.mulf %35, %27 : vector<8x128xf32>
    %47 = arith.addf %45, %46 : vector<8x128xf32>
    %48 = math.tanh %47 : vector<8x128xf32>
    %cst_26 = arith.constant 1.000000e+00 : f32
    %49 = vector.broadcast %cst_26 : f32 to vector<8x128xf32>
    %50 = arith.subf %49, %43 : vector<8x128xf32>
    %51 = arith.mulf %50, %48 : vector<8x128xf32>
    %52 = arith.mulf %43, %3 : vector<8x128xf32>
    %53 = arith.addf %51, %52 : vector<8x128xf32>
    %c0_27 = arith.constant 0 : index
    %c0_28 = arith.constant 0 : index
    %54 = vector.load %arg5[%c0_27, %c0_28] : memref<8x128xf32, #tpu.memory_space<vmem>>, vector<8x128xf32>
    tpu.vector_store %arg5[%c0_27, %c0_28], %53 {strides = array<i32>} : memref<8x128xf32, #tpu.memory_space<vmem>>, vector<8x128xf32>,
    %55 = arith.index_cast %c0_i32_1 : i32 to index
    %c0_29 = arith.constant 0 : index
    %c0_30 = arith.constant 0 : index
    %56 = vector.load %arg4[%55, %c0_29, %c0_30] : memref<4x8x128xf32, #tpu.memory_space<vmem>>, vector<1x8x128xf32>
    %57 = vector.shape_cast %56 : vector<1x8x128xf32> to vector<8x128xf32>
    %58 = vector.shape_cast %53 : vector<8x128xf32> to vector<1x8x128xf32>
    tpu.vector_store %arg4[%55, %c0_29, %c0_30], %58 {strides = array<i32>} : memref<4x8x128xf32, #tpu.memory_space<vmem>>, vector<1x8x128xf32>,
    %c1_i32 = arith.constant 1 : i32
    %c0_31 = arith.constant 0 : index
    %c0_32 = arith.constant 0 : index
    %59 = vector.load %arg5[%c0_31, %c0_32] : memref<8x128xf32, #tpu.memory_space<vmem>>, vector<8x128xf32>
    %60 = arith.index_cast %c1_i32 : i32 to index
    %c0_33 = arith.constant 0 : index
    %c0_34 = arith.constant 0 : index
    %c0_35 = arith.constant 0 : index
    %61 = vector.load %arg1[%60, %c0_33, %c0_34, %c0_35] : memref<4x3x8x128xf32, #tpu.memory_space<vmem>>, vector<1x3x8x128xf32>
    %62 = vector.shape_cast %61 : vector<1x3x8x128xf32> to vector<3x8x128xf32>
    %c0_36 = arith.constant 0 : index
    %c0_37 = arith.constant 0 : index
    %c0_38 = arith.constant 0 : index
    %63 = vector.load %arg2[%c0_36, %c0_37, %c0_38] : memref<3x128x128xf32, #tpu.memory_space<vmem>>, vector<1x128x128xf32>
    %64 = vector.shape_cast %63 : vector<1x128x128xf32> to vector<128x128xf32>
    %cst_39 = arith.constant dense<0.000000e+00> : vector<8x128xf32>
    %65 = tpu.matmul %59, %64, %cst_39 {dimension_numbers = #tpu.dot_dimension_numbers<[1], [0], [0], [1], [0, 0, 1, 1], [], []>} : vector<8x128xf32>, vector<128x128xf32>, vector<8x128xf32> -> vector<8x128xf32>
    %c0_40 = arith.constant 0 : index
    %c0_41 = arith.constant 0 : index
    %c0_42 = arith.constant 0 : index
    %66 = vector.load %arg3[%c0_40, %c0_41, %c0_42] : memref<3x1x128xf32, #tpu.memory_space<vmem>>, vector<1x1x128xf32>
    %67 = vector.shape_cast %66 : vector<1x1x128xf32> to vector<1x128xf32>
    %68 = vector.broadcast %67 : vector<1x128xf32> to vector<8x128xf32>
    %69 = arith.addf %65, %68 : vector<8x128xf32>
    %c1_43 = arith.constant 1 : index
    %c0_44 = arith.constant 0 : index
    %c0_45 = arith.constant 0 : index
    %70 = vector.load %arg2[%c1_43, %c0_44, %c0_45] : memref<3x128x128xf32, #tpu.memory_space<vmem>>, vector<1x128x128xf32>
    %71 = vector.shape_cast %70 : vector<1x128x128xf32> to vector<128x128xf32>
    %cst_46 = arith.constant dense<0.000000e+00> : vector<8x128xf32>
    %72 = tpu.matmul %59, %71, %cst_46 {dimension_numbers = #tpu.dot_dimension_numbers<[1], [0], [0], [1], [0, 0, 1, 1], [], []>} : vector<8x128xf32>, vector<128x128xf32>, vector<8x128xf32> -> vector<8x128xf32>
    %c1_47 = arith.constant 1 : index
    %c0_48 = arith.constant 0 : index
    %c0_49 = arith.constant 0 : index
    %73 = vector.load %arg3[%c1_47, %c0_48, %c0_49] : memref<3x1x128xf32, #tpu.memory_space<vmem>>, vector<1x1x128xf32>
    %74 = vector.shape_cast %73 : vector<1x1x128xf32> to vector<1x128xf32>
    %75 = vector.broadcast %74 : vector<1x128xf32> to vector<8x128xf32>
    %76 = arith.addf %72, %75 : vector<8x128xf32>
    %c2_50 = arith.constant 2 : index
    %c0_51 = arith.constant 0 : index
    %c0_52 = arith.constant 0 : index
    %77 = vector.load %arg2[%c2_50, %c0_51, %c0_52] : memref<3x128x128xf32, #tpu.memory_space<vmem>>, vector<1x128x128xf32>
    %78 = vector.shape_cast %77 : vector<1x128x128xf32> to vector<128x128xf32>
    %cst_53 = arith.constant dense<0.000000e+00> : vector<8x128xf32>
    %79 = tpu.matmul %59, %78, %cst_53 {dimension_numbers = #tpu.dot_dimension_numbers<[1], [0], [0], [1], [0, 0, 1, 1], [], []>} : vector<8x128xf32>, vector<128x128xf32>, vector<8x128xf32> -> vector<8x128xf32>
    %c2_54 = arith.constant 2 : index
    %c0_55 = arith.constant 0 : index
    %c0_56 = arith.constant 0 : index
    %80 = vector.load %arg3[%c2_54, %c0_55, %c0_56] : memref<3x1x128xf32, #tpu.memory_space<vmem>>, vector<1x1x128xf32>
    %81 = vector.shape_cast %80 : vector<1x1x128xf32> to vector<1x128xf32>
    %82 = vector.broadcast %81 : vector<1x128xf32> to vector<8x128xf32>
    %83 = arith.addf %79, %82 : vector<8x128xf32>
    %84 = vector.extract_strided_slice %62 {offsets = [0, 0, 0], sizes = [1, 8, 128], strides = [1, 1, 1]} : vector<3x8x128xf32> to vector<1x8x128xf32>
    %85 = vector.shape_cast %84 : vector<1x8x128xf32> to vector<8x128xf32>
    %86 = arith.addf %85, %69 : vector<8x128xf32>
    %87 = arith.negf %86 : vector<8x128xf32>
    %88 = math.exp %87 : vector<8x128xf32>
    %cst_57 = arith.constant 1.000000e+00 : f32
    %89 = vector.broadcast %cst_57 : f32 to vector<8x128xf32>
    %90 = arith.addf %89, %88 : vector<8x128xf32>
    %91 = arith.divf %89, %90 : vector<8x128xf32>
    %92 = vector.extract_strided_slice %62 {offsets = [1, 0, 0], sizes = [1, 8, 128], strides = [1, 1, 1]} : vector<3x8x128xf32> to vector<1x8x128xf32>
    %93 = vector.shape_cast %92 : vector<1x8x128xf32> to vector<8x128xf32>
    %94 = arith.addf %93, %76 : vector<8x128xf32>
    %95 = arith.negf %94 : vector<8x128xf32>
    %96 = math.exp %95 : vector<8x128xf32>
    %cst_58 = arith.constant 1.000000e+00 : f32
    %97 = vector.broadcast %cst_58 : f32 to vector<8x128xf32>
    %98 = arith.addf %97, %96 : vector<8x128xf32>
    %99 = arith.divf %97, %98 : vector<8x128xf32>
    %100 = vector.extract_strided_slice %62 {offsets = [2, 0, 0], sizes = [1, 8, 128], strides = [1, 1, 1]} : vector<3x8x128xf32> to vector<1x8x128xf32>
    %101 = vector.shape_cast %100 : vector<1x8x128xf32> to vector<8x128xf32>
    %102 = arith.mulf %91, %83 : vector<8x128xf32>
    %103 = arith.addf %101, %102 : vector<8x128xf32>
    %104 = math.tanh %103 : vector<8x128xf32>
    %cst_59 = arith.constant 1.000000e+00 : f32
    %105 = vector.broadcast %cst_59 : f32 to vector<8x128xf32>
    %106 = arith.subf %105, %99 : vector<8x128xf32>
    %107 = arith.mulf %106, %104 : vector<8x128xf32>
    %108 = arith.mulf %99, %59 : vector<8x128xf32>
    %109 = arith.addf %107, %108 : vector<8x128xf32>
    %c0_60 = arith.constant 0 : index
    %c0_61 = arith.constant 0 : index
    %110 = vector.load %arg5[%c0_60, %c0_61] : memref<8x128xf32, #tpu.memory_space<vmem>>, vector<8x128xf32>
    tpu.vector_store %arg5[%c0_60, %c0_61], %109 {strides = array<i32>} : memref<8x128xf32, #tpu.memory_space<vmem>>, vector<8x128xf32>,
    %111 = arith.index_cast %c1_i32 : i32 to index
    %c0_62 = arith.constant 0 : index
    %c0_63 = arith.constant 0 : index
    %112 = vector.load %arg4[%111, %c0_62, %c0_63] : memref<4x8x128xf32, #tpu.memory_space<vmem>>, vector<1x8x128xf32>
    %113 = vector.shape_cast %112 : vector<1x8x128xf32> to vector<8x128xf32>
    %114 = vector.shape_cast %109 : vector<8x128xf32> to vector<1x8x128xf32>
    tpu.vector_store %arg4[%111, %c0_62, %c0_63], %114 {strides = array<i32>} : memref<4x8x128xf32, #tpu.memory_space<vmem>>, vector<1x8x128xf32>,
    %c2_i32 = arith.constant 2 : i32
    %c0_64 = arith.constant 0 : index
    %c0_65 = arith.constant 0 : index
    %115 = vector.load %arg5[%c0_64, %c0_65] : memref<8x128xf32, #tpu.memory_space<vmem>>, vector<8x128xf32>
    %116 = arith.index_cast %c2_i32 : i32 to index
    %c0_66 = arith.constant 0 : index
    %c0_67 = arith.constant 0 : index
    %c0_68 = arith.constant 0 : index
    %117 = vector.load %arg1[%116, %c0_66, %c0_67, %c0_68] : memref<4x3x8x128xf32, #tpu.memory_space<vmem>>, vector<1x3x8x128xf32>
    %118 = vector.shape_cast %117 : vector<1x3x8x128xf32> to vector<3x8x128xf32>
    %c0_69 = arith.constant 0 : index
    %c0_70 = arith.constant 0 : index
    %c0_71 = arith.constant 0 : index
    %119 = vector.load %arg2[%c0_69, %c0_70, %c0_71] : memref<3x128x128xf32, #tpu.memory_space<vmem>>, vector<1x128x128xf32>
    %120 = vector.shape_cast %119 : vector<1x128x128xf32> to vector<128x128xf32>
    %cst_72 = arith.constant dense<0.000000e+00> : vector<8x128xf32>
    %121 = tpu.matmul %115, %120, %cst_72 {dimension_numbers = #tpu.dot_dimension_numbers<[1], [0], [0], [1], [0, 0, 1, 1], [], []>} : vector<8x128xf32>, vector<128x128xf32>, vector<8x128xf32> -> vector<8x128xf32>
    %c0_73 = arith.constant 0 : index
    %c0_74 = arith.constant 0 : index
    %c0_75 = arith.constant 0 : index
    %122 = vector.load %arg3[%c0_73, %c0_74, %c0_75] : memref<3x1x128xf32, #tpu.memory_space<vmem>>, vector<1x1x128xf32>
    %123 = vector.shape_cast %122 : vector<1x1x128xf32> to vector<1x128xf32>
    %124 = vector.broadcast %123 : vector<1x128xf32> to vector<8x128xf32>
    %125 = arith.addf %121, %124 : vector<8x128xf32>
    %c1_76 = arith.constant 1 : index
    %c0_77 = arith.constant 0 : index
    %c0_78 = arith.constant 0 : index
    %126 = vector.load %arg2[%c1_76, %c0_77, %c0_78] : memref<3x128x128xf32, #tpu.memory_space<vmem>>, vector<1x128x128xf32>
    %127 = vector.shape_cast %126 : vector<1x128x128xf32> to vector<128x128xf32>
    %cst_79 = arith.constant dense<0.000000e+00> : vector<8x128xf32>
    %128 = tpu.matmul %115, %127, %cst_79 {dimension_numbers = #tpu.dot_dimension_numbers<[1], [0], [0], [1], [0, 0, 1, 1], [], []>} : vector<8x128xf32>, vector<128x128xf32>, vector<8x128xf32> -> vector<8x128xf32>
    %c1_80 = arith.constant 1 : index
    %c0_81 = arith.constant 0 : index
    %c0_82 = arith.constant 0 : index
    %129 = vector.load %arg3[%c1_80, %c0_81, %c0_82] : memref<3x1x128xf32, #tpu.memory_space<vmem>>, vector<1x1x128xf32>
    %130 = vector.shape_cast %129 : vector<1x1x128xf32> to vector<1x128xf32>
    %131 = vector.broadcast %130 : vector<1x128xf32> to vector<8x128xf32>
    %132 = arith.addf %128, %131 : vector<8x128xf32>
    %c2_83 = arith.constant 2 : index
    %c0_84 = arith.constant 0 : index
    %c0_85 = arith.constant 0 : index
    %133 = vector.load %arg2[%c2_83, %c0_84, %c0_85] : memref<3x128x128xf32, #tpu.memory_space<vmem>>, vector<1x128x128xf32>
    %134 = vector.shape_cast %133 : vector<1x128x128xf32> to vector<128x128xf32>
    %cst_86 = arith.constant dense<0.000000e+00> : vector<8x128xf32>
    %135 = tpu.matmul %115, %134, %cst_86 {dimension_numbers = #tpu.dot_dimension_numbers<[1], [0], [0], [1], [0, 0, 1, 1], [], []>} : vector<8x128xf32>, vector<128x128xf32>, vector<8x128xf32> -> vector<8x128xf32>
    %c2_87 = arith.constant 2 : index
    %c0_88 = arith.constant 0 : index
    %c0_89 = arith.constant 0 : index
    %136 = vector.load %arg3[%c2_87, %c0_88, %c0_89] : memref<3x1x128xf32, #tpu.memory_space<vmem>>, vector<1x1x128xf32>
    %137 = vector.shape_cast %136 : vector<1x1x128xf32> to vector<1x128xf32>
    %138 = vector.broadcast %137 : vector<1x128xf32> to vector<8x128xf32>
    %139 = arith.addf %135, %138 : vector<8x128xf32>
    %140 = vector.extract_strided_slice %118 {offsets = [0, 0, 0], sizes = [1, 8, 128], strides = [1, 1, 1]} : vector<3x8x128xf32> to vector<1x8x128xf32>
    %141 = vector.shape_cast %140 : vector<1x8x128xf32> to vector<8x128xf32>
    %142 = arith.addf %141, %125 : vector<8x128xf32>
    %143 = arith.negf %142 : vector<8x128xf32>
    %144 = math.exp %143 : vector<8x128xf32>
    %cst_90 = arith.constant 1.000000e+00 : f32
    %145 = vector.broadcast %cst_90 : f32 to vector<8x128xf32>
    %146 = arith.addf %145, %144 : vector<8x128xf32>
    %147 = arith.divf %145, %146 : vector<8x128xf32>
    %148 = vector.extract_strided_slice %118 {offsets = [1, 0, 0], sizes = [1, 8, 128], strides = [1, 1, 1]} : vector<3x8x128xf32> to vector<1x8x128xf32>
    %149 = vector.shape_cast %148 : vector<1x8x128xf32> to vector<8x128xf32>
    %150 = arith.addf %149, %132 : vector<8x128xf32>
    %151 = arith.negf %150 : vector<8x128xf32>
    %152 = math.exp %151 : vector<8x128xf32>
    %cst_91 = arith.constant 1.000000e+00 : f32
    %153 = vector.broadcast %cst_91 : f32 to vector<8x128xf32>
    %154 = arith.addf %153, %152 : vector<8x128xf32>
    %155 = arith.divf %153, %154 : vector<8x128xf32>
    %156 = vector.extract_strided_slice %118 {offsets = [2, 0, 0], sizes = [1, 8, 128], strides = [1, 1, 1]} : vector<3x8x128xf32> to vector<1x8x128xf32>
    %157 = vector.shape_cast %156 : vector<1x8x128xf32> to vector<8x128xf32>
    %158 = arith.mulf %147, %139 : vector<8x128xf32>
    %159 = arith.addf %157, %158 : vector<8x128xf32>
    %160 = math.tanh %159 : vector<8x128xf32>
    %cst_92 = arith.constant 1.000000e+00 : f32
    %161 = vector.broadcast %cst_92 : f32 to vector<8x128xf32>
    %162 = arith.subf %161, %155 : vector<8x128xf32>
    %163 = arith.mulf %162, %160 : vector<8x128xf32>
    %164 = arith.mulf %155, %115 : vector<8x128xf32>
    %165 = arith.addf %163, %164 : vector<8x128xf32>
    %c0_93 = arith.constant 0 : index
    %c0_94 = arith.constant 0 : index
    %166 = vector.load %arg5[%c0_93, %c0_94] : memref<8x128xf32, #tpu.memory_space<vmem>>, vector<8x128xf32>
    tpu.vector_store %arg5[%c0_93, %c0_94], %165 {strides = array<i32>} : memref<8x128xf32, #tpu.memory_space<vmem>>, vector<8x128xf32>,
    %167 = arith.index_cast %c2_i32 : i32 to index
    %c0_95 = arith.constant 0 : index
    %c0_96 = arith.constant 0 : index
    %168 = vector.load %arg4[%167, %c0_95, %c0_96] : memref<4x8x128xf32, #tpu.memory_space<vmem>>, vector<1x8x128xf32>
    %169 = vector.shape_cast %168 : vector<1x8x128xf32> to vector<8x128xf32>
    %170 = vector.shape_cast %165 : vector<8x128xf32> to vector<1x8x128xf32>
    tpu.vector_store %arg4[%167, %c0_95, %c0_96], %170 {strides = array<i32>} : memref<4x8x128xf32, #tpu.memory_space<vmem>>, vector<1x8x128xf32>,
    %c3_i32 = arith.constant 3 : i32
    %c0_97 = arith.constant 0 : index
    %c0_98 = arith.constant 0 : index
    %171 = vector.load %arg5[%c0_97, %c0_98] : memref<8x128xf32, #tpu.memory_space<vmem>>, vector<8x128xf32>
    %172 = arith.index_cast %c3_i32 : i32 to index
    %c0_99 = arith.constant 0 : index
    %c0_100 = arith.constant 0 : index
    %c0_101 = arith.constant 0 : index
    %173 = vector.load %arg1[%172, %c0_99, %c0_100, %c0_101] : memref<4x3x8x128xf32, #tpu.memory_space<vmem>>, vector<1x3x8x128xf32>
    %174 = vector.shape_cast %173 : vector<1x3x8x128xf32> to vector<3x8x128xf32>
    %c0_102 = arith.constant 0 : index
    %c0_103 = arith.constant 0 : index
    %c0_104 = arith.constant 0 : index
    %175 = vector.load %arg2[%c0_102, %c0_103, %c0_104] : memref<3x128x128xf32, #tpu.memory_space<vmem>>, vector<1x128x128xf32>
    %176 = vector.shape_cast %175 : vector<1x128x128xf32> to vector<128x128xf32>
    %cst_105 = arith.constant dense<0.000000e+00> : vector<8x128xf32>
    %177 = tpu.matmul %171, %176, %cst_105 {dimension_numbers = #tpu.dot_dimension_numbers<[1], [0], [0], [1], [0, 0, 1, 1], [], []>} : vector<8x128xf32>, vector<128x128xf32>, vector<8x128xf32> -> vector<8x128xf32>
    %c0_106 = arith.constant 0 : index
    %c0_107 = arith.constant 0 : index
    %c0_108 = arith.constant 0 : index
    %178 = vector.load %arg3[%c0_106, %c0_107, %c0_108] : memref<3x1x128xf32, #tpu.memory_space<vmem>>, vector<1x1x128xf32>
    %179 = vector.shape_cast %178 : vector<1x1x128xf32> to vector<1x128xf32>
    %180 = vector.broadcast %179 : vector<1x128xf32> to vector<8x128xf32>
    %181 = arith.addf %177, %180 : vector<8x128xf32>
    %c1_109 = arith.constant 1 : index
    %c0_110 = arith.constant 0 : index
    %c0_111 = arith.constant 0 : index
    %182 = vector.load %arg2[%c1_109, %c0_110, %c0_111] : memref<3x128x128xf32, #tpu.memory_space<vmem>>, vector<1x128x128xf32>
    %183 = vector.shape_cast %182 : vector<1x128x128xf32> to vector<128x128xf32>
    %cst_112 = arith.constant dense<0.000000e+00> : vector<8x128xf32>
    %184 = tpu.matmul %171, %183, %cst_112 {dimension_numbers = #tpu.dot_dimension_numbers<[1], [0], [0], [1], [0, 0, 1, 1], [], []>} : vector<8x128xf32>, vector<128x128xf32>, vector<8x128xf32> -> vector<8x128xf32>
    %c1_113 = arith.constant 1 : index
    %c0_114 = arith.constant 0 : index
    %c0_115 = arith.constant 0 : index
    %185 = vector.load %arg3[%c1_113, %c0_114, %c0_115] : memref<3x1x128xf32, #tpu.memory_space<vmem>>, vector<1x1x128xf32>
    %186 = vector.shape_cast %185 : vector<1x1x128xf32> to vector<1x128xf32>
    %187 = vector.broadcast %186 : vector<1x128xf32> to vector<8x128xf32>
    %188 = arith.addf %184, %187 : vector<8x128xf32>
    %c2_116 = arith.constant 2 : index
    %c0_117 = arith.constant 0 : index
    %c0_118 = arith.constant 0 : index
    %189 = vector.load %arg2[%c2_116, %c0_117, %c0_118] : memref<3x128x128xf32, #tpu.memory_space<vmem>>, vector<1x128x128xf32>
    %190 = vector.shape_cast %189 : vector<1x128x128xf32> to vector<128x128xf32>
    %cst_119 = arith.constant dense<0.000000e+00> : vector<8x128xf32>
    %191 = tpu.matmul %171, %190, %cst_119 {dimension_numbers = #tpu.dot_dimension_numbers<[1], [0], [0], [1], [0, 0, 1, 1], [], []>} : vector<8x128xf32>, vector<128x128xf32>, vector<8x128xf32> -> vector<8x128xf32>
    %c2_120 = arith.constant 2 : index
    %c0_121 = arith.constant 0 : index
    %c0_122 = arith.constant 0 : index
    %192 = vector.load %arg3[%c2_120, %c0_121, %c0_122] : memref<3x1x128xf32, #tpu.memory_space<vmem>>, vector<1x1x128xf32>
    %193 = vector.shape_cast %192 : vector<1x1x128xf32> to vector<1x128xf32>
    %194 = vector.broadcast %193 : vector<1x128xf32> to vector<8x128xf32>
    %195 = arith.addf %191, %194 : vector<8x128xf32>
    %196 = vector.extract_strided_slice %174 {offsets = [0, 0, 0], sizes = [1, 8, 128], strides = [1, 1, 1]} : vector<3x8x128xf32> to vector<1x8x128xf32>
    %197 = vector.shape_cast %196 : vector<1x8x128xf32> to vector<8x128xf32>
    %198 = arith.addf %197, %181 : vector<8x128xf32>
    %199 = arith.negf %198 : vector<8x128xf32>
    %200 = math.exp %199 : vector<8x128xf32>
    %cst_123 = arith.constant 1.000000e+00 : f32
    %201 = vector.broadcast %cst_123 : f32 to vector<8x128xf32>
    %202 = arith.addf %201, %200 : vector<8x128xf32>
    %203 = arith.divf %201, %202 : vector<8x128xf32>
    %204 = vector.extract_strided_slice %174 {offsets = [1, 0, 0], sizes = [1, 8, 128], strides = [1, 1, 1]} : vector<3x8x128xf32> to vector<1x8x128xf32>
    %205 = vector.shape_cast %204 : vector<1x8x128xf32> to vector<8x128xf32>
    %206 = arith.addf %205, %188 : vector<8x128xf32>
    %207 = arith.negf %206 : vector<8x128xf32>
    %208 = math.exp %207 : vector<8x128xf32>
    %cst_124 = arith.constant 1.000000e+00 : f32
    %209 = vector.broadcast %cst_124 : f32 to vector<8x128xf32>
    %210 = arith.addf %209, %208 : vector<8x128xf32>
    %211 = arith.divf %209, %210 : vector<8x128xf32>
    %212 = vector.extract_strided_slice %174 {offsets = [2, 0, 0], sizes = [1, 8, 128], strides = [1, 1, 1]} : vector<3x8x128xf32> to vector<1x8x128xf32>
    %213 = vector.shape_cast %212 : vector<1x8x128xf32> to vector<8x128xf32>
    %214 = arith.mulf %203, %195 : vector<8x128xf32>
    %215 = arith.addf %213, %214 : vector<8x128xf32>
    %216 = math.tanh %215 : vector<8x128xf32>
    %cst_125 = arith.constant 1.000000e+00 : f32
    %217 = vector.broadcast %cst_125 : f32 to vector<8x128xf32>
    %218 = arith.subf %217, %211 : vector<8x128xf32>
    %219 = arith.mulf %218, %216 : vector<8x128xf32>
    %220 = arith.mulf %211, %171 : vector<8x128xf32>
    %221 = arith.addf %219, %220 : vector<8x128xf32>
    %c0_126 = arith.constant 0 : index
    %c0_127 = arith.constant 0 : index
    %222 = vector.load %arg5[%c0_126, %c0_127] : memref<8x128xf32, #tpu.memory_space<vmem>>, vector<8x128xf32>
    tpu.vector_store %arg5[%c0_126, %c0_127], %221 {strides = array<i32>} : memref<8x128xf32, #tpu.memory_space<vmem>>, vector<8x128xf32>,
    %223 = arith.index_cast %c3_i32 : i32 to index
    %c0_128 = arith.constant 0 : index
    %c0_129 = arith.constant 0 : index
    %224 = vector.load %arg4[%223, %c0_128, %c0_129] : memref<4x8x128xf32, #tpu.memory_space<vmem>>, vector<1x8x128xf32>
    %225 = vector.shape_cast %224 : vector<1x8x128xf32> to vector<8x128xf32>
    %226 = vector.shape_cast %221 : vector<8x128xf32> to vector<1x8x128xf32>
    tpu.vector_store %arg4[%223, %c0_128, %c0_129], %226 {strides = array<i32>} : memref<4x8x128xf32, #tpu.memory_space<vmem>>, vector<1x8x128xf32>,
    %c4_i32 = arith.constant 4 : i32
    return
  }
  func.func @transform_0(%arg0: i32) -> (i32, i32, i32, i32) {
    %c0_i32 = arith.constant 0 : i32
    %c0_i32_0 = arith.constant 0 : i32
    %c0_i32_1 = arith.constant 0 : i32
    %c0_i32_2 = arith.constant 0 : i32
    return %arg0, %c0_i32, %c0_i32_0, %c0_i32_1 : i32, i32, i32, i32
  }
  func.func @transform_1(%arg0: i32) -> (i32, i32, i32) {
    %c0_i32 = arith.constant 0 : i32
    %c0_i32_0 = arith.constant 0 : i32
    %c0_i32_1 = arith.constant 0 : i32
    %c0_i32_2 = arith.constant 0 : i32
    return %c0_i32, %c0_i32_0, %c0_i32_1 : i32, i32, i32
  }
  func.func @transform_2(%arg0: i32) -> (i32, i32, i32) {
    %c0_i32 = arith.constant 0 : i32
    %c0_i32_0 = arith.constant 0 : i32
    %c0_i32_1 = arith.constant 0 : i32
    %c0_i32_2 = arith.constant 0 : i32
    return %c0_i32, %c0_i32_0, %c0_i32_1 : i32, i32, i32
  }
  func.func @transform_3(%arg0: i32) -> (i32, i32, i32) {
    %c0_i32 = arith.constant 0 : i32
    %c0_i32_0 = arith.constant 0 : i32
    %c0_i32_1 = arith.constant 0 : i32
    return %arg0, %c0_i32, %c0_i32_0 : i32, i32, i32
  }
}

</mosaic_0001>

<llo_original>
// kernel: encoder_rnn_forward.1
$region0: #{encoder_rnn_forward.1}
  #allocation0 [shape = 'u32[]', space=smem, size = 0x4, offset = 0x4, fixed_abs, tag = 'smem constant byte address 0x4 - core index']
  #allocation1 [shape = 'u32[72,128]{1,0:T(1,128)}', space=vmem, size = 0x9000, scoped, tag = 'internal scratch']
  #allocation2 [shape = 'f32[8,128]{1,0:T(8,128)}', space=vmem, size = 0x1000, scoped, tag = 'scratch operand']
  %s0 = inlined_call_operand.vmem [shape: f32[8,3,8,128], index: 0, kind: input, shape index: {}]
  %s1 = inlined_call_operand.vmem [shape: f32[3,128,128], index: 1, kind: input, shape index: {}]
  %s2 = inlined_call_operand.vmem [shape: f32[3,1,128], index: 2, kind: input, shape index: {}]
  %s3 = inlined_call_operand.vmem [shape: f32[8,8,128], index: 3, kind: output, shape index: {}]
  %s4 = sld [smem:[#allocation0]]
  $region49: #{encoder_rnn_forward.1} parent=0
    _
  %s6 = ssub.s32 1, %s4
  %s7 = scalar_select 0, %s6, %s4
  loop: start=0, step=1, limit=4
  $region2: #{encoder_rnn_forward.1} parent=0 // loop_pre_header
    _
  $region3: #{encoder_rnn_forward.1} parent=0 // loop_header
    %s9 = sphi 0, %s13
    %p10 = scmp.ge.s32.totalorder %s9, 4
    %s19 = sphi 0, %s21
    %s22 = sphi 0, %s19
    %s23 = sphi 0, %s22
    %s39 = sphi 0, %s23
    %s43 = sphi 0, %s43
    %s45 = sphi 0, %s43
    %s46 = sphi 0, %s45
    %s60 = sphi 0, %s46
    %s64 = sphi 0, %s64
    %s66 = sphi 0, %s64
    %s67 = sphi 0, %s66
    %s81 = sphi 0, %s67
    %s87 = sphi 0, %s89
    %s90 = sphi 0, %s87
    %s91 = sphi 0, %s90
    %s107 = sphi 0, %s91
  $region4: #{encoder_rnn_forward.1} parent=0 // loop_header_branch
    %12 = sbr.rel (%p10) target = $region8
  $region5: #{encoder_rnn_forward.1} parent=0 // loop_body
    %s14 = ssub.s32 %s9, 1
    %s15 = ssub.s32 %s9, 2
    %s16 = sadd.s32 %s9, 1
    %s17 = ssub.s32 %s9, %s16
    %p18 = scmp.eq.s32.totalorder %s17, 0
    %s20 = sadd.s32 %s19, 1
    %s21 = scalar_select %p18, %s19, %s20
    %p24 = pneg %p18
    %p25 = scmp.eq.s32.totalorder %s9, 1
    %p26 = por %p24, %p25
    %p27 = scmp.ne.s32.totalorder %s19, %s22
    %p28 = scmp.eq.s32.totalorder %s9, 0
    %p29 = por %p27, %p28
    %p30 = scmp.ne.s32.totalorder %s19, %s22
    %p31 = scmp.eq.s32.totalorder %s14, 1
    %p32 = por %p30, %p31
    %p33 = scmp.ne.s32.totalorder %s22, %s23
    %p34 = scmp.eq.s32.totalorder %s14, 0
    %p35 = por %p33, %p34
    %p36 = scmp.ne.s32.totalorder %s22, %s23
    %p37 = scmp.eq.s32.totalorder %s15, 1
    %p38 = por %p36, %p37
    %p40 = scmp.ne.s32.totalorder %s23, %s39
    %p41 = scmp.eq.s32.totalorder %s15, 0
    %p42 = por %p40, %p41
    %s44 = sadd.s32 %s43, 1
    %p47 = scmp.eq.s32.totalorder %s9, 1
    %p48 = scmp.ne.s32.totalorder %s43, %s45
    %p49 = scmp.eq.s32.totalorder %s9, 0
    %p50 = por %p48, %p49
    %p51 = scmp.ne.s32.totalorder %s43, %s45
    %p52 = scmp.eq.s32.totalorder %s14, 1
    %p53 = por %p51, %p52
    %p54 = scmp.ne.s32.totalorder %s45, %s46
    %p55 = scmp.eq.s32.totalorder %s14, 0
    %p56 = por %p54, %p55
    %p57 = scmp.ne.s32.totalorder %s45, %s46
    %p58 = scmp.eq.s32.totalorder %s15, 1
    %p59 = por %p57, %p58
    %p61 = scmp.ne.s32.totalorder %s46, %s60
    %p62 = scmp.eq.s32.totalorder %s15, 0
    %p63 = por %p61, %p62
    %s65 = sadd.s32 %s64, 1
    %p68 = scmp.eq.s32.totalorder %s9, 1
    %p69 = scmp.ne.s32.totalorder %s64, %s66
    %p70 = scmp.eq.s32.totalorder %s9, 0
    %p71 = por %p69, %p70
    %p72 = scmp.ne.s32.totalorder %s64, %s66
    %p73 = scmp.eq.s32.totalorder %s14, 1
    %p74 = por %p72, %p73
    %p75 = scmp.ne.s32.totalorder %s66, %s67
    %p76 = scmp.eq.s32.totalorder %s14, 0
    %p77 = por %p75, %p76
    %p78 = scmp.ne.s32.totalorder %s66, %s67
    %p79 = scmp.eq.s32.totalorder %s15, 1
    %p80 = por %p78, %p79
    %p82 = scmp.ne.s32.totalorder %s67, %s81
    %p83 = scmp.eq.s32.totalorder %s15, 0
    %p84 = por %p82, %p83
    %s85 = ssub.s32 %s9, %s16
    %p86 = scmp.eq.s32.totalorder %s85, 0
    %s88 = sadd.s32 %s87, 1
    %s89 = scalar_select %p86, %s87, %s88
    %p92 = pneg %p86
    %p93 = scmp.eq.s32.totalorder %s9, 1
    %p94 = por %p92, %p93
    %p95 = scmp.ne.s32.totalorder %s87, %s90
    %p96 = scmp.eq.s32.totalorder %s9, 0
    %p97 = por %p95, %p96
    %p98 = scmp.ne.s32.totalorder %s87, %s90
    %p99 = scmp.eq.s32.totalorder %s14, 1
    %p100 = por %p98, %p99
    %p101 = scmp.ne.s32.totalorder %s90, %s91
    %p102 = scmp.eq.s32.totalorder %s14, 0
    %p103 = por %p101, %p102
    %p104 = scmp.ne.s32.totalorder %s90, %s91
    %p105 = scmp.eq.s32.totalorder %s15, 1
    %p106 = por %p104, %p105
    %p108 = scmp.ne.s32.totalorder %s91, %s107
    %p109 = scmp.eq.s32.totalorder %s15, 0
    %p110 = por %p108, %p109
    %p111 = scmp.le.s32.totalorder 1, %s9
    %p112 = scmp.lt.s32.totalorder %s9, 3
    %p113 = pnand %p111, %p112
    %p114 = pneg %p113
    // Predicated region
    $region9: #{encoder_rnn_forward.1} parent=5 // pred_check
      _
    $region10: #{encoder_rnn_forward.1} parent=5 // pred_check_branch
      %116 = sbr.rel (%p113) target = $region12
    $region11: #{encoder_rnn_forward.1} parent=5 // pred_region
      %s117 = ssub.s32 %s9, 1
      // Predicated region
      $region13: #{encoder_rnn_forward.1} parent=11 // pred_check
        %p118 = pneg %p56
      $region14: #{encoder_rnn_forward.1} parent=11 // pred_check_branch
        %120 = sbr.rel (%p118) target = $region16
      $region15: #{encoder_rnn_forward.1} parent=11 // pred_region
        _
      $region16: #{encoder_rnn_forward.1} parent=11 // pred_fallthru
        _
      // Predicated region
      $region17: #{encoder_rnn_forward.1} parent=11 // pred_check
        %p121 = pneg %p77
      $region18: #{encoder_rnn_forward.1} parent=11 // pred_check_branch
        %123 = sbr.rel (%p121) target = $region20
      $region19: #{encoder_rnn_forward.1} parent=11 // pred_region
        _
      $region20: #{encoder_rnn_forward.1} parent=11 // pred_fallthru
        _
    $region12: #{encoder_rnn_forward.1} parent=5 // pred_fallthru
      _
    %p124 = scmp.lt.s32.totalorder %s9, 2
    // Predicated region
    $region21: #{encoder_rnn_forward.1} parent=5 // pred_check
      %p125 = pneg %p124
    $region22: #{encoder_rnn_forward.1} parent=5 // pred_check_branch
      %127 = sbr.rel (%p125) target = $region24
    $region23: #{encoder_rnn_forward.1} parent=5 // pred_region
      // Predicated region
      $region25: #{encoder_rnn_forward.1} parent=23 // pred_check
        %p128 = pneg %p29
      $region26: #{encoder_rnn_forward.1} parent=23 // pred_check_branch
        %130 = sbr.rel (%p128) target = $region28
      $region27: #{encoder_rnn_forward.1} parent=23 // pred_region
        %s131 = smul.u32 4, %s9
        %p132 = scmp.lt.s32.totalorder %s131, 7
        %s133 = scalar_select %p132, %s131, 7
        %s134 = smul.addr %s133, 3
        %s135 = smul.addr %s134, 8
        %s136 = scalar_lea.vmem %s0, %s135
        %s137 = smul.u32 4, %s9
      $region28: #{encoder_rnn_forward.1} parent=23 // pred_fallthru
        _
    $region24: #{encoder_rnn_forward.1} parent=5 // pred_fallthru
      _
    %p138 = scmp.le.s32.totalorder 1, %s9
    %p139 = scmp.lt.s32.totalorder %s9, 3
    %p140 = pnand %p138, %p139
    %p141 = pneg %p140
    // Predicated region
    $region29: #{encoder_rnn_forward.1} parent=5 // pred_check
      _
    $region30: #{encoder_rnn_forward.1} parent=5 // pred_check_branch
      %143 = sbr.rel (%p140) target = $region32
    $region31: #{encoder_rnn_forward.1} parent=5 // pred_region
      %s144 = ssub.s32 %s9, 1
      %s145 = smul.u32 4, %s14
      %p146 = scmp.lt.s32.totalorder %s145, 7
      %s147 = scalar_select %p146, %s145, 7
      %s148 = smul.addr %s147, 3
      %s149 = smul.addr %s148, 8
      %s150 = scalar_lea.vmem %s0, %s149
      %p151 = pneg %p35
      %p152 = pneg %p32
      %p153 = pneg %p56
      %p154 = pneg %p53
      %p155 = pneg %p77
      %p156 = pneg %p74
      %p157 = pneg %p103
      %p158 = pneg %p100
      %s159 = smul.u32 4, %s14
      %p160 = scmp.lt.s32.totalorder %s159, 7
      %s161 = scalar_select %p160, %s159, 7
      %s162 = smul.addr %s161, 8
      %s163 = scalar_lea.vmem %s3, %s162
      %s164 = smul.u32 4, %s14
      %p165 = scmp.lt.s32.totalorder %s164, 7
      %s166 = scalar_select %p165, %s164, 7
      %s167 = smul.addr %s166, 3
      %s168 = smul.addr %s167, 8
      %s169 = scalar_lea.vmem %s0, %s168
      %s170 = smul.u32 4, %s14
      %s171 = smul.u32 4, %s14
      %p172 = scmp.lt.s32.totalorder %s171, 7
      %s173 = scalar_select %p172, %s171, 7
      %s174 = smul.addr %s173, 8
      %s175 = scalar_lea.vmem %s3, %s174
      %s176 = smul.u32 4, %s14
      %p177 = scmp.eq.s32.totalorder %s14, 0
      // Predicated region
      $region33: #{encoder_rnn_forward.1} parent=31 // pred_check
        %p178 = pneg %p177
      $region34: #{encoder_rnn_forward.1} parent=31 // pred_check_branch
        %180 = sbr.rel (%p178) target = $region36
      $region35: #{encoder_rnn_forward.1} parent=31 // pred_region
        %181 = vst [vmem:[#allocation2] sm:$0xff] 0.0
      $region36: #{encoder_rnn_forward.1} parent=31 // pred_fallthru
        _
      %v182 = vld [vmem:[#allocation2] sm:$0xff]
      %v183 = vld [vmem:[%s169] sm:$0xff]
      %v184 = vld [vmem:[%s169 + $0x8] sm:$0xff]
      %v185 = vld [vmem:[%s169 + $0x10] sm:$0xff]
      %v186 = vld [vmem:[%s1] sm:$0xff]
      %v187 = vld [vmem:[%s1 + $0x8] sm:$0xff]
      %v188 = vld [vmem:[%s1 + $0x10] sm:$0xff]
      %v189 = vld [vmem:[%s1 + $0x18] sm:$0xff]
      %v190 = vld [vmem:[%s1 + $0x20] sm:$0xff]
      %v191 = vld [vmem:[%s1 + $0x28] sm:$0xff]
      %v192 = vld [vmem:[%s1 + $0x30] sm:$0xff]
      %v193 = vld [vmem:[%s1 + $0x38] sm:$0xff]
      %v194 = vld [vmem:[%s1 + $0x40] sm:$0xff]
      %v195 = vld [vmem:[%s1 + $0x48] sm:$0xff]
      %v196 = vld [vmem:[%s1 + $0x50] sm:$0xff]
      %v197 = vld [vmem:[%s1 + $0x58] sm:$0xff]
      %v198 = vld [vmem:[%s1 + $0x60] sm:$0xff]
      %v199 = vld [vmem:[%s1 + $0x68] sm:$0xff]
      %v200 = vld [vmem:[%s1 + $0x70] sm:$0xff]
      %v201 = vld [vmem:[%s1 + $0x78] sm:$0xff]
      %v202 = vld [vmem:[%s2] sm:$0x1]
      %v204 = vperm.slane %v202, 0
      %206 = vmatpush.msra.mxu0 %v201
      %207 = vmatpush.msra.mxu0 %v200
      %208 = vmatpush.msra.mxu0 %v199
      %209 = vmatpush.msra.mxu0 %v198
      %210 = vmatpush.msra.mxu0 %v197
      %211 = vmatpush.msra.mxu0 %v196
      %212 = vmatpush.msra.mxu0 %v195
      %213 = vmatpush.msra.mxu0 %v194
      %214 = vmatpush.msra.mxu0 %v193
      %215 = vmatpush.msra.mxu0 %v192
      %216 = vmatpush.msra.mxu0 %v191
      %217 = vmatpush.msra.mxu0 %v190
      %218 = vmatpush.msra.mxu0 %v189
      %219 = vmatpush.msra.mxu0 %v188
      %220 = vmatpush.msra.mxu0 %v187
      %221 = vmatpush.msra.mxu0 %v186
      %222 = vmatmul.f32.gmra.mxu0 %v182
      %v223 = vpop.f32.mrf.mxu0
      %v224 = vadd.f32 %v204, %v223
      %225 = vdwg.mxu0
      %s226 = scalar_lea.vmem %s1, 128
      %v227 = vld [vmem:[%s226] sm:$0xff]
      %v228 = vld [vmem:[%s226 + $0x8] sm:$0xff]
      %v229 = vld [vmem:[%s226 + $0x10] sm:$0xff]
      %v230 = vld [vmem:[%s226 + $0x18] sm:$0xff]
      %v231 = vld [vmem:[%s226 + $0x20] sm:$0xff]
      %v232 = vld [vmem:[%s226 + $0x28] sm:$0xff]
      %v233 = vld [vmem:[%s226 + $0x30] sm:$0xff]
      %v234 = vld [vmem:[%s226 + $0x38] sm:$0xff]
      %v235 = vld [vmem:[%s226 + $0x40] sm:$0xff]
      %v236 = vld [vmem:[%s226 + $0x48] sm:$0xff]
      %v237 = vld [vmem:[%s226 + $0x50] sm:$0xff]
      %v238 = vld [vmem:[%s226 + $0x58] sm:$0xff]
      %v239 = vld [vmem:[%s226 + $0x60] sm:$0xff]
      %v240 = vld [vmem:[%s226 + $0x68] sm:$0xff]
      %v241 = vld [vmem:[%s226 + $0x70] sm:$0xff]
      %v242 = vld [vmem:[%s226 + $0x78] sm:$0xff]
      %s243 = scalar_lea.vmem %s2, 1
      %v244 = vld [vmem:[%s243] sm:$0x1]
      %v246 = vperm.slane %v244, 0
      %248 = vmatpush.msra.mxu0 %v242
      %249 = vmatpush.msra.mxu0 %v241
      %250 = vmatpush.msra.mxu0 %v240
      %251 = vmatpush.msra.mxu0 %v239
      %252 = vmatpush.msra.mxu0 %v238
      %253 = vmatpush.msra.mxu0 %v237
      %254 = vmatpush.msra.mxu0 %v236
      %255 = vmatpush.msra.mxu0 %v235
      %256 = vmatpush.msra.mxu0 %v234
      %257 = vmatpush.msra.mxu0 %v233
      %258 = vmatpush.msra.mxu0 %v232
      %259 = vmatpush.msra.mxu0 %v231
      %260 = vmatpush.msra.mxu0 %v230
      %261 = vmatpush.msra.mxu0 %v229
      %262 = vmatpush.msra.mxu0 %v228
      %263 = vmatpush.msra.mxu0 %v227
      %264 = vmatmul.f32.gmra.mxu0 %v182
      %v265 = vpop.f32.mrf.mxu0
      %v266 = vadd.f32 %v246, %v265
      %267 = vdwg.mxu0
      %s268 = scalar_lea.vmem %s1, 256
      %v269 = vld [vmem:[%s268] sm:$0xff]
      %v270 = vld [vmem:[%s268 + $0x8] sm:$0xff]
      %v271 = vld [vmem:[%s268 + $0x10] sm:$0xff]
      %v272 = vld [vmem:[%s268 + $0x18] sm:$0xff]
      %v273 = vld [vmem:[%s268 + $0x20] sm:$0xff]
      %v274 = vld [vmem:[%s268 + $0x28] sm:$0xff]
      %v275 = vld [vmem:[%s268 + $0x30] sm:$0xff]
      %v276 = vld [vmem:[%s268 + $0x38] sm:$0xff]
      %v277 = vld [vmem:[%s268 + $0x40] sm:$0xff]
      %v278 = vld [vmem:[%s268 + $0x48] sm:$0xff]
      %v279 = vld [vmem:[%s268 + $0x50] sm:$0xff]
      %v280 = vld [vmem:[%s268 + $0x58] sm:$0xff]
      %v281 = vld [vmem:[%s268 + $0x60] sm:$0xff]
      %v282 = vld [vmem:[%s268 + $0x68] sm:$0xff]
      %v283 = vld [vmem:[%s268 + $0x70] sm:$0xff]
      %v284 = vld [vmem:[%s268 + $0x78] sm:$0xff]
      %s285 = scalar_lea.vmem %s2, 2
      %v286 = vld [vmem:[%s285] sm:$0x1]
      %v288 = vperm.slane %v286, 0
      %290 = vmatpush.msra.mxu0 %v284
      %291 = vmatpush.msra.mxu0 %v283
      %292 = vmatpush.msra.mxu0 %v282
      %293 = vmatpush.msra.mxu0 %v281
      %294 = vmatpush.msra.mxu0 %v280
      %295 = vmatpush.msra.mxu0 %v279
      %296 = vmatpush.msra.mxu0 %v278
      %297 = vmatpush.msra.mxu0 %v277
      %298 = vmatpush.msra.mxu0 %v276
      %299 = vmatpush.msra.mxu0 %v275
      %300 = vmatpush.msra.mxu0 %v274
      %301 = vmatpush.msra.mxu0 %v273
      %302 = vmatpush.msra.mxu0 %v272
      %303 = vmatpush.msra.mxu0 %v271
      %304 = vmatpush.msra.mxu0 %v270
      %305 = vmatpush.msra.mxu0 %v269
      %306 = vmatmul.f32.gmra.mxu0 %v182
      %v307 = vpop.f32.mrf.mxu0
      %v308 = vadd.f32 %v288, %v307
      %309 = vdwg.mxu0
      %v310 = vadd.f32 %v183, %v224
      %v311 = vxor.u32 %v310, 2147483648
      %v312 = vmul.f32 %v311, 1.442695
      %v313 = vpow.pop %v312
      %v314 = vadd.f32 %v313, 1.0
      %v315 = vrcp.pop %v314
      %v316 = vmul.f32 %v314, %v315
      %v317 = vsub.f32 1.0, %v316
      %v318 = vmul.f32 %v315, %v317
      %v319 = vadd.f32 %v315, %v318
      %vm320 = vweird.f32 %v314
      %vm321 = vweird.f32 %v315
      %vm322 = vmor %vm320, %vm321
      %v323 = vsel %vm322, %v315, %v319
      %v324 = vand.u32 2147483647, %v314
      %vm325 = vcmp.eq.f32.partialorder %v324, 8.507059e+37
      %v326 = vand.u32 %v314, 2147483648
      %v327 = vor.u32 1.1754944e-38, %v326
      %v328 = vsel %vm325, %v327, %v323
      %v329 = vmul.f32 1.0, %v328
      %v330 = vadd.f32 %v184, %v266
      %v331 = vxor.u32 %v330, 2147483648
      %v332 = vmul.f32 %v331, 1.442695
      %v333 = vpow.pop %v332
      %v334 = vadd.f32 %v333, 1.0
      %v335 = vrcp.pop %v334
      %v336 = vmul.f32 %v334, %v335
      %v337 = vsub.f32 1.0, %v336
      %v338 = vmul.f32 %v335, %v337
      %v339 = vadd.f32 %v335, %v338
      %vm340 = vweird.f32 %v334
      %vm341 = vweird.f32 %v335
      %vm342 = vmor %vm340, %vm341
      %v343 = vsel %vm342, %v335, %v339
      %v344 = vand.u32 2147483647, %v334
      %vm345 = vcmp.eq.f32.partialorder %v344, 8.507059e+37
      %v346 = vand.u32 %v334, 2147483648
      %v347 = vor.u32 1.1754944e-38, %v346
      %v348 = vsel %vm345, %v347, %v343
      %v349 = vmul.f32 1.0, %v348
      %v350 = vmul.f32 %v329, %v308
      %v351 = vadd.f32 %v185, %v350
      %v352 = vtanh.pop %v351
      %v353 = vsub.f32 1.0, %v349
      %v354 = vmul.f32 %v353, %v352
      %v355 = vmul.f32 %v349, %v182
      %v356 = vadd.f32 %v354, %v355
      %357 = vst [vmem:[#allocation2] sm:$0xff] %v356
      %358 = vst [vmem:[%s175] sm:$0xff] %v356
      %v359 = vld [vmem:[#allocation2] sm:$0xff]
      %s360 = scalar_lea.vmem %s169, 24
      %v361 = vld [vmem:[%s360] sm:$0xff]
      %v362 = vld [vmem:[%s360 + $0x8] sm:$0xff]
      %v363 = vld [vmem:[%s360 + $0x10] sm:$0xff]
      %v364 = vld [vmem:[%s1] sm:$0xff]
      %v365 = vld [vmem:[%s1 + $0x8] sm:$0xff]
      %v366 = vld [vmem:[%s1 + $0x10] sm:$0xff]
      %v367 = vld [vmem:[%s1 + $0x18] sm:$0xff]
      %v368 = vld [vmem:[%s1 + $0x20] sm:$0xff]
      %v369 = vld [vmem:[%s1 + $0x28] sm:$0xff]
      %v370 = vld [vmem:[%s1 + $0x30] sm:$0xff]
      %v371 = vld [vmem:[%s1 + $0x38] sm:$0xff]
      %v372 = vld [vmem:[%s1 + $0x40] sm:$0xff]
      %v373 = vld [vmem:[%s1 + $0x48] sm:$0xff]
      %v374 = vld [vmem:[%s1 + $0x50] sm:$0xff]
      %v375 = vld [vmem:[%s1 + $0x58] sm:$0xff]
      %v376 = vld [vmem:[%s1 + $0x60] sm:$0xff]
      %v377 = vld [vmem:[%s1 + $0x68] sm:$0xff]
      %v378 = vld [vmem:[%s1 + $0x70] sm:$0xff]
      %v379 = vld [vmem:[%s1 + $0x78] sm:$0xff]
      %v380 = vld [vmem:[%s2] sm:$0x1]
      %v382 = vperm.slane %v380, 0
      %384 = vmatpush.msra.mxu0 %v379
      %385 = vmatpush.msra.mxu0 %v378
      %386 = vmatpush.msra.mxu0 %v377
      %387 = vmatpush.msra.mxu0 %v376
      %388 = vmatpush.msra.mxu0 %v375
      %389 = vmatpush.msra.mxu0 %v374
      %390 = vmatpush.msra.mxu0 %v373
      %391 = vmatpush.msra.mxu0 %v372
      %392 = vmatpush.msra.mxu0 %v371
      %393 = vmatpush.msra.mxu0 %v370
      %394 = vmatpush.msra.mxu0 %v369
      %395 = vmatpush.msra.mxu0 %v368
      %396 = vmatpush.msra.mxu0 %v367
      %397 = vmatpush.msra.mxu0 %v366
      %398 = vmatpush.msra.mxu0 %v365
      %399 = vmatpush.msra.mxu0 %v364
      %400 = vmatmul.f32.gmra.mxu0 %v359
      %v401 = vpop.f32.mrf.mxu0
      %v402 = vadd.f32 %v382, %v401
      %403 = vdwg.mxu0
      %v404 = vld [vmem:[%s226] sm:$0xff]
      %v405 = vld [vmem:[%s226 + $0x8] sm:$0xff]
      %v406 = vld [vmem:[%s226 + $0x10] sm:$0xff]
      %v407 = vld [vmem:[%s226 + $0x18] sm:$0xff]
      %v408 = vld [vmem:[%s226 + $0x20] sm:$0xff]
      %v409 = vld [vmem:[%s226 + $0x28] sm:$0xff]
      %v410 = vld [vmem:[%s226 + $0x30] sm:$0xff]
      %v411 = vld [vmem:[%s226 + $0x38] sm:$0xff]
      %v412 = vld [vmem:[%s226 + $0x40] sm:$0xff]
      %v413 = vld [vmem:[%s226 + $0x48] sm:$0xff]
      %v414 = vld [vmem:[%s226 + $0x50] sm:$0xff]
      %v415 = vld [vmem:[%s226 + $0x58] sm:$0xff]
      %v416 = vld [vmem:[%s226 + $0x60] sm:$0xff]
      %v417 = vld [vmem:[%s226 + $0x68] sm:$0xff]
      %v418 = vld [vmem:[%s226 + $0x70] sm:$0xff]
      %v419 = vld [vmem:[%s226 + $0x78] sm:$0xff]
      %v420 = vld [vmem:[%s243] sm:$0x1]
      %v422 = vperm.slane %v420, 0
      %424 = vmatpush.msra.mxu0 %v419
      %425 = vmatpush.msra.mxu0 %v418
      %426 = vmatpush.msra.mxu0 %v417
      %427 = vmatpush.msra.mxu0 %v416
      %428 = vmatpush.msra.mxu0 %v415
      %429 = vmatpush.msra.mxu0 %v414
      %430 = vmatpush.msra.mxu0 %v413
      %431 = vmatpush.msra.mxu0 %v412
      %432 = vmatpush.msra.mxu0 %v411
      %433 = vmatpush.msra.mxu0 %v410
      %434 = vmatpush.msra.mxu0 %v409
      %435 = vmatpush.msra.mxu0 %v408
      %436 = vmatpush.msra.mxu0 %v407
      %437 = vmatpush.msra.mxu0 %v406
      %438 = vmatpush.msra.mxu0 %v405
      %439 = vmatpush.msra.mxu0 %v404
      %440 = vmatmul.f32.gmra.mxu0 %v359
      %v441 = vpop.f32.mrf.mxu0
      %v442 = vadd.f32 %v422, %v441
      %443 = vdwg.mxu0
      %v444 = vld [vmem:[%s268] sm:$0xff]
      %v445 = vld [vmem:[%s268 + $0x8] sm:$0xff]
      %v446 = vld [vmem:[%s268 + $0x10] sm:$0xff]
      %v447 = vld [vmem:[%s268 + $0x18] sm:$0xff]
      %v448 = vld [vmem:[%s268 + $0x20] sm:$0xff]
      %v449 = vld [vmem:[%s268 + $0x28] sm:$0xff]
      %v450 = vld [vmem:[%s268 + $0x30] sm:$0xff]
      %v451 = vld [vmem:[%s268 + $0x38] sm:$0xff]
      %v452 = vld [vmem:[%s268 + $0x40] sm:$0xff]
      %v453 = vld [vmem:[%s268 + $0x48] sm:$0xff]
      %v454 = vld [vmem:[%s268 + $0x50] sm:$0xff]
      %v455 = vld [vmem:[%s268 + $0x58] sm:$0xff]
      %v456 = vld [vmem:[%s268 + $0x60] sm:$0xff]
      %v457 = vld [vmem:[%s268 + $0x68] sm:$0xff]
      %v458 = vld [vmem:[%s268 + $0x70] sm:$0xff]
      %v459 = vld [vmem:[%s268 + $0x78] sm:$0xff]
      %v460 = vld [vmem:[%s285] sm:$0x1]
      %v462 = vperm.slane %v460, 0
      %464 = vmatpush.msra.mxu0 %v459
      %465 = vmatpush.msra.mxu0 %v458
      %466 = vmatpush.msra.mxu0 %v457
      %467 = vmatpush.msra.mxu0 %v456
      %468 = vmatpush.msra.mxu0 %v455
      %469 = vmatpush.msra.mxu0 %v454
      %470 = vmatpush.msra.mxu0 %v453
      %471 = vmatpush.msra.mxu0 %v452
      %472 = vmatpush.msra.mxu0 %v451
      %473 = vmatpush.msra.mxu0 %v450
      %474 = vmatpush.msra.mxu0 %v449
      %475 = vmatpush.msra.mxu0 %v448
      %476 = vmatpush.msra.mxu0 %v447
      %477 = vmatpush.msra.mxu0 %v446
      %478 = vmatpush.msra.mxu0 %v445
      %479 = vmatpush.msra.mxu0 %v444
      %480 = vmatmul.f32.gmra.mxu0 %v359
      %v481 = vpop.f32.mrf.mxu0
      %v482 = vadd.f32 %v462, %v481
      %483 = vdwg.mxu0
      %v484 = vadd.f32 %v361, %v402
      %v485 = vxor.u32 %v484, 2147483648
      %v486 = vmul.f32 %v485, 1.442695
      %v487 = vpow.pop %v486
      %v488 = vadd.f32 %v487, 1.0
      %v489 = vrcp.pop %v488
      %v490 = vmul.f32 %v488, %v489
      %v491 = vsub.f32 1.0, %v490
      %v492 = vmul.f32 %v489, %v491
      %v493 = vadd.f32 %v489, %v492
      %vm494 = vweird.f32 %v488
      %vm495 = vweird.f32 %v489
      %vm496 = vmor %vm494, %vm495
      %v497 = vsel %vm496, %v489, %v493
      %v498 = vand.u32 2147483647, %v488
      %vm499 = vcmp.eq.f32.partialorder %v498, 8.507059e+37
      %v500 = vand.u32 %v488, 2147483648
      %v501 = vor.u32 1.1754944e-38, %v500
      %v502 = vsel %vm499, %v501, %v497
      %v503 = vmul.f32 1.0, %v502
      %v504 = vadd.f32 %v362, %v442
      %v505 = vxor.u32 %v504, 2147483648
      %v506 = vmul.f32 %v505, 1.442695
      %v507 = vpow.pop %v506
      %v508 = vadd.f32 %v507, 1.0
      %v509 = vrcp.pop %v508
      %v510 = vmul.f32 %v508, %v509
      %v511 = vsub.f32 1.0, %v510
      %v512 = vmul.f32 %v509, %v511
      %v513 = vadd.f32 %v509, %v512
      %vm514 = vweird.f32 %v508
      %vm515 = vweird.f32 %v509
      %vm516 = vmor %vm514, %vm515
      %v517 = vsel %vm516, %v509, %v513
      %v518 = vand.u32 2147483647, %v508
      %vm519 = vcmp.eq.f32.partialorder %v518, 8.507059e+37
      %v520 = vand.u32 %v508, 2147483648
      %v521 = vor.u32 1.1754944e-38, %v520
      %v522 = vsel %vm519, %v521, %v517
      %v523 = vmul.f32 1.0, %v522
      %v524 = vmul.f32 %v503, %v482
      %v525 = vadd.f32 %v363, %v524
      %v526 = vtanh.pop %v525
      %v527 = vsub.f32 1.0, %v523
      %v528 = vmul.f32 %v527, %v526
      %v529 = vmul.f32 %v523, %v359
      %v530 = vadd.f32 %v528, %v529
      %531 = vst [vmem:[#allocation2] sm:$0xff] %v530
      %s532 = scalar_lea.vmem %s175, 8
      %533 = vst [vmem:[%s532] sm:$0xff] %v530
      %v534 = vld [vmem:[#allocation2] sm:$0xff]
      %s535 = scalar_lea.vmem %s169, 48
      %v536 = vld [vmem:[%s535] sm:$0xff]
      %v537 = vld [vmem:[%s535 + $0x8] sm:$0xff]
      %v538 = vld [vmem:[%s535 + $0x10] sm:$0xff]
      %v539 = vld [vmem:[%s1] sm:$0xff]
      %v540 = vld [vmem:[%s1 + $0x8] sm:$0xff]
      %v541 = vld [vmem:[%s1 + $0x10] sm:$0xff]
      %v542 = vld [vmem:[%s1 + $0x18] sm:$0xff]
      %v543 = vld [vmem:[%s1 + $0x20] sm:$0xff]
      %v544 = vld [vmem:[%s1 + $0x28] sm:$0xff]
      %v545 = vld [vmem:[%s1 + $0x30] sm:$0xff]
      %v546 = vld [vmem:[%s1 + $0x38] sm:$0xff]
      %v547 = vld [vmem:[%s1 + $0x40] sm:$0xff]
      %v548 = vld [vmem:[%s1 + $0x48] sm:$0xff]
      %v549 = vld [vmem:[%s1 + $0x50] sm:$0xff]
      %v550 = vld [vmem:[%s1 + $0x58] sm:$0xff]
      %v551 = vld [vmem:[%s1 + $0x60] sm:$0xff]
      %v552 = vld [vmem:[%s1 + $0x68] sm:$0xff]
      %v553 = vld [vmem:[%s1 + $0x70] sm:$0xff]
      %v554 = vld [vmem:[%s1 + $0x78] sm:$0xff]
      %v555 = vld [vmem:[%s2] sm:$0x1]
      %v557 = vperm.slane %v555, 0
      %559 = vmatpush.msra.mxu0 %v554
      %560 = vmatpush.msra.mxu0 %v553
      %561 = vmatpush.msra.mxu0 %v552
      %562 = vmatpush.msra.mxu0 %v551
      %563 = vmatpush.msra.mxu0 %v550
      %564 = vmatpush.msra.mxu0 %v549
      %565 = vmatpush.msra.mxu0 %v548
      %566 = vmatpush.msra.mxu0 %v547
      %567 = vmatpush.msra.mxu0 %v546
      %568 = vmatpush.msra.mxu0 %v545
      %569 = vmatpush.msra.mxu0 %v544
      %570 = vmatpush.msra.mxu0 %v543
      %571 = vmatpush.msra.mxu0 %v542
      %572 = vmatpush.msra.mxu0 %v541
      %573 = vmatpush.msra.mxu0 %v540
      %574 = vmatpush.msra.mxu0 %v539
      %575 = vmatmul.f32.gmra.mxu0 %v534
      %v576 = vpop.f32.mrf.mxu0
      %v577 = vadd.f32 %v557, %v576
      %578 = vdwg.mxu0
      %v579 = vld [vmem:[%s226] sm:$0xff]
      %v580 = vld [vmem:[%s226 + $0x8] sm:$0xff]
      %v581 = vld [vmem:[%s226 + $0x10] sm:$0xff]
      %v582 = vld [vmem:[%s226 + $0x18] sm:$0xff]
      %v583 = vld [vmem:[%s226 + $0x20] sm:$0xff]
      %v584 = vld [vmem:[%s226 + $0x28] sm:$0xff]
      %v585 = vld [vmem:[%s226 + $0x30] sm:$0xff]
      %v586 = vld [vmem:[%s226 + $0x38] sm:$0xff]
      %v587 = vld [vmem:[%s226 + $0x40] sm:$0xff]
      %v588 = vld [vmem:[%s226 + $0x48] sm:$0xff]
      %v589 = vld [vmem:[%s226 + $0x50] sm:$0xff]
      %v590 = vld [vmem:[%s226 + $0x58] sm:$0xff]
      %v591 = vld [vmem:[%s226 + $0x60] sm:$0xff]
      %v592 = vld [vmem:[%s226 + $0x68] sm:$0xff]
      %v593 = vld [vmem:[%s226 + $0x70] sm:$0xff]
      %v594 = vld [vmem:[%s226 + $0x78] sm:$0xff]
      %v595 = vld [vmem:[%s243] sm:$0x1]
      %v597 = vperm.slane %v595, 0
      %599 = vmatpush.msra.mxu0 %v594
      %600 = vmatpush.msra.mxu0 %v593
      %601 = vmatpush.msra.mxu0 %v592
      %602 = vmatpush.msra.mxu0 %v591
      %603 = vmatpush.msra.mxu0 %v590
      %604 = vmatpush.msra.mxu0 %v589
      %605 = vmatpush.msra.mxu0 %v588
      %606 = vmatpush.msra.mxu0 %v587
      %607 = vmatpush.msra.mxu0 %v586
      %608 = vmatpush.msra.mxu0 %v585
      %609 = vmatpush.msra.mxu0 %v584
      %610 = vmatpush.msra.mxu0 %v583
      %611 = vmatpush.msra.mxu0 %v582
      %612 = vmatpush.msra.mxu0 %v581
      %613 = vmatpush.msra.mxu0 %v580
      %614 = vmatpush.msra.mxu0 %v579
      %615 = vmatmul.f32.gmra.mxu0 %v534
      %v616 = vpop.f32.mrf.mxu0
      %v617 = vadd.f32 %v597, %v616
      %618 = vdwg.mxu0
      %v619 = vld [vmem:[%s268] sm:$0xff]
      %v620 = vld [vmem:[%s268 + $0x8] sm:$0xff]
      %v621 = vld [vmem:[%s268 + $0x10] sm:$0xff]
      %v622 = vld [vmem:[%s268 + $0x18] sm:$0xff]
      %v623 = vld [vmem:[%s268 + $0x20] sm:$0xff]
      %v624 = vld [vmem:[%s268 + $0x28] sm:$0xff]
      %v625 = vld [vmem:[%s268 + $0x30] sm:$0xff]
      %v626 = vld [vmem:[%s268 + $0x38] sm:$0xff]
      %v627 = vld [vmem:[%s268 + $0x40] sm:$0xff]
      %v628 = vld [vmem:[%s268 + $0x48] sm:$0xff]
      %v629 = vld [vmem:[%s268 + $0x50] sm:$0xff]
      %v630 = vld [vmem:[%s268 + $0x58] sm:$0xff]
      %v631 = vld [vmem:[%s268 + $0x60] sm:$0xff]
      %v632 = vld [vmem:[%s268 + $0x68] sm:$0xff]
      %v633 = vld [vmem:[%s268 + $0x70] sm:$0xff]
      %v634 = vld [vmem:[%s268 + $0x78] sm:$0xff]
      %v635 = vld [vmem:[%s285] sm:$0x1]
      %v637 = vperm.slane %v635, 0
      %639 = vmatpush.msra.mxu0 %v634
      %640 = vmatpush.msra.mxu0 %v633
      %641 = vmatpush.msra.mxu0 %v632
      %642 = vmatpush.msra.mxu0 %v631
      %643 = vmatpush.msra.mxu0 %v630
      %644 = vmatpush.msra.mxu0 %v629
      %645 = vmatpush.msra.mxu0 %v628
      %646 = vmatpush.msra.mxu0 %v627
      %647 = vmatpush.msra.mxu0 %v626
      %648 = vmatpush.msra.mxu0 %v625
      %649 = vmatpush.msra.mxu0 %v624
      %650 = vmatpush.msra.mxu0 %v623
      %651 = vmatpush.msra.mxu0 %v622
      %652 = vmatpush.msra.mxu0 %v621
      %653 = vmatpush.msra.mxu0 %v620
      %654 = vmatpush.msra.mxu0 %v619
      %655 = vmatmul.f32.gmra.mxu0 %v534
      %v656 = vpop.f32.mrf.mxu0
      %v657 = vadd.f32 %v637, %v656
      %658 = vdwg.mxu0
      %v659 = vadd.f32 %v536, %v577
      %v660 = vxor.u32 %v659, 2147483648
      %v661 = vmul.f32 %v660, 1.442695
      %v662 = vpow.pop %v661
      %v663 = vadd.f32 %v662, 1.0
      %v664 = vrcp.pop %v663
      %v665 = vmul.f32 %v663, %v664
      %v666 = vsub.f32 1.0, %v665
      %v667 = vmul.f32 %v664, %v666
      %v668 = vadd.f32 %v664, %v667
      %vm669 = vweird.f32 %v663
      %vm670 = vweird.f32 %v664
      %vm671 = vmor %vm669, %vm670
      %v672 = vsel %vm671, %v664, %v668
      %v673 = vand.u32 2147483647, %v663
      %vm674 = vcmp.eq.f32.partialorder %v673, 8.507059e+37
      %v675 = vand.u32 %v663, 2147483648
      %v676 = vor.u32 1.1754944e-38, %v675
      %v677 = vsel %vm674, %v676, %v672
      %v678 = vmul.f32 1.0, %v677
      %v679 = vadd.f32 %v537, %v617
      %v680 = vxor.u32 %v679, 2147483648
      %v681 = vmul.f32 %v680, 1.442695
      %v682 = vpow.pop %v681
      %v683 = vadd.f32 %v682, 1.0
      %v684 = vrcp.pop %v683
      %v685 = vmul.f32 %v683, %v684
      %v686 = vsub.f32 1.0, %v685
      %v687 = vmul.f32 %v684, %v686
      %v688 = vadd.f32 %v684, %v687
      %vm689 = vweird.f32 %v683
      %vm690 = vweird.f32 %v684
      %vm691 = vmor %vm689, %vm690
      %v692 = vsel %vm691, %v684, %v688
      %v693 = vand.u32 2147483647, %v683
      %vm694 = vcmp.eq.f32.partialorder %v693, 8.507059e+37
      %v695 = vand.u32 %v683, 2147483648
      %v696 = vor.u32 1.1754944e-38, %v695
      %v697 = vsel %vm694, %v696, %v692
      %v698 = vmul.f32 1.0, %v697
      %v699 = vmul.f32 %v678, %v657
      %v700 = vadd.f32 %v538, %v699
      %v701 = vtanh.pop %v700
      %v702 = vsub.f32 1.0, %v698
      %v703 = vmul.f32 %v702, %v701
      %v704 = vmul.f32 %v698, %v534
      %v705 = vadd.f32 %v703, %v704
      %706 = vst [vmem:[#allocation2] sm:$0xff] %v705
      %s707 = scalar_lea.vmem %s175, 16
      %708 = vst [vmem:[%s707] sm:$0xff] %v705
      %v709 = vld [vmem:[#allocation2] sm:$0xff]
      %s710 = scalar_lea.vmem %s169, 72
      %v711 = vld [vmem:[%s710] sm:$0xff]
      %v712 = vld [vmem:[%s710 + $0x8] sm:$0xff]
      %v713 = vld [vmem:[%s710 + $0x10] sm:$0xff]
      %v714 = vld [vmem:[%s1] sm:$0xff]
      %v715 = vld [vmem:[%s1 + $0x8] sm:$0xff]
      %v716 = vld [vmem:[%s1 + $0x10] sm:$0xff]
      %v717 = vld [vmem:[%s1 + $0x18] sm:$0xff]
      %v718 = vld [vmem:[%s1 + $0x20] sm:$0xff]
      %v719 = vld [vmem:[%s1 + $0x28] sm:$0xff]
      %v720 = vld [vmem:[%s1 + $0x30] sm:$0xff]
      %v721 = vld [vmem:[%s1 + $0x38] sm:$0xff]
      %v722 = vld [vmem:[%s1 + $0x40] sm:$0xff]
      %v723 = vld [vmem:[%s1 + $0x48] sm:$0xff]
      %v724 = vld [vmem:[%s1 + $0x50] sm:$0xff]
      %v725 = vld [vmem:[%s1 + $0x58] sm:$0xff]
      %v726 = vld [vmem:[%s1 + $0x60] sm:$0xff]
      %v727 = vld [vmem:[%s1 + $0x68] sm:$0xff]
      %v728 = vld [vmem:[%s1 + $0x70] sm:$0xff]
      %v729 = vld [vmem:[%s1 + $0x78] sm:$0xff]
      %v730 = vld [vmem:[%s2] sm:$0x1]
      %v732 = vperm.slane %v730, 0
      %734 = vmatpush.msra.mxu0 %v729
      %735 = vmatpush.msra.mxu0 %v728
      %736 = vmatpush.msra.mxu0 %v727
      %737 = vmatpush.msra.mxu0 %v726
      %738 = vmatpush.msra.mxu0 %v725
      %739 = vmatpush.msra.mxu0 %v724
      %740 = vmatpush.msra.mxu0 %v723
      %741 = vmatpush.msra.mxu0 %v722
      %742 = vmatpush.msra.mxu0 %v721
      %743 = vmatpush.msra.mxu0 %v720
      %744 = vmatpush.msra.mxu0 %v719
      %745 = vmatpush.msra.mxu0 %v718
      %746 = vmatpush.msra.mxu0 %v717
      %747 = vmatpush.msra.mxu0 %v716
      %748 = vmatpush.msra.mxu0 %v715
      %749 = vmatpush.msra.mxu0 %v714
      %750 = vmatmul.f32.gmra.mxu0 %v709
      %v751 = vpop.f32.mrf.mxu0
      %v752 = vadd.f32 %v732, %v751
      %753 = vdwg.mxu0
      %v754 = vld [vmem:[%s226] sm:$0xff]
      %v755 = vld [vmem:[%s226 + $0x8] sm:$0xff]
      %v756 = vld [vmem:[%s226 + $0x10] sm:$0xff]
      %v757 = vld [vmem:[%s226 + $0x18] sm:$0xff]
      %v758 = vld [vmem:[%s226 + $0x20] sm:$0xff]
      %v759 = vld [vmem:[%s226 + $0x28] sm:$0xff]
      %v760 = vld [vmem:[%s226 + $0x30] sm:$0xff]
      %v761 = vld [vmem:[%s226 + $0x38] sm:$0xff]
      %v762 = vld [vmem:[%s226 + $0x40] sm:$0xff]
      %v763 = vld [vmem:[%s226 + $0x48] sm:$0xff]
      %v764 = vld [vmem:[%s226 + $0x50] sm:$0xff]
      %v765 = vld [vmem:[%s226 + $0x58] sm:$0xff]
      %v766 = vld [vmem:[%s226 + $0x60] sm:$0xff]
      %v767 = vld [vmem:[%s226 + $0x68] sm:$0xff]
      %v768 = vld [vmem:[%s226 + $0x70] sm:$0xff]
      %v769 = vld [vmem:[%s226 + $0x78] sm:$0xff]
      %v770 = vld [vmem:[%s243] sm:$0x1]
      %v772 = vperm.slane %v770, 0
      %774 = vmatpush.msra.mxu0 %v769
      %775 = vmatpush.msra.mxu0 %v768
      %776 = vmatpush.msra.mxu0 %v767
      %777 = vmatpush.msra.mxu0 %v766
      %778 = vmatpush.msra.mxu0 %v765
      %779 = vmatpush.msra.mxu0 %v764
      %780 = vmatpush.msra.mxu0 %v763
      %781 = vmatpush.msra.mxu0 %v762
      %782 = vmatpush.msra.mxu0 %v761
      %783 = vmatpush.msra.mxu0 %v760
      %784 = vmatpush.msra.mxu0 %v759
      %785 = vmatpush.msra.mxu0 %v758
      %786 = vmatpush.msra.mxu0 %v757
      %787 = vmatpush.msra.mxu0 %v756
      %788 = vmatpush.msra.mxu0 %v755
      %789 = vmatpush.msra.mxu0 %v754
      %790 = vmatmul.f32.gmra.mxu0 %v709
      %v791 = vpop.f32.mrf.mxu0
      %v792 = vadd.f32 %v772, %v791
      %793 = vdwg.mxu0
      %v794 = vld [vmem:[%s268] sm:$0xff]
      %v795 = vld [vmem:[%s268 + $0x8] sm:$0xff]
      %v796 = vld [vmem:[%s268 + $0x10] sm:$0xff]
      %v797 = vld [vmem:[%s268 + $0x18] sm:$0xff]
      %v798 = vld [vmem:[%s268 + $0x20] sm:$0xff]
      %v799 = vld [vmem:[%s268 + $0x28] sm:$0xff]
      %v800 = vld [vmem:[%s268 + $0x30] sm:$0xff]
      %v801 = vld [vmem:[%s268 + $0x38] sm:$0xff]
      %v802 = vld [vmem:[%s268 + $0x40] sm:$0xff]
      %v803 = vld [vmem:[%s268 + $0x48] sm:$0xff]
      %v804 = vld [vmem:[%s268 + $0x50] sm:$0xff]
      %v805 = vld [vmem:[%s268 + $0x58] sm:$0xff]
      %v806 = vld [vmem:[%s268 + $0x60] sm:$0xff]
      %v807 = vld [vmem:[%s268 + $0x68] sm:$0xff]
      %v808 = vld [vmem:[%s268 + $0x70] sm:$0xff]
      %v809 = vld [vmem:[%s268 + $0x78] sm:$0xff]
      %v810 = vld [vmem:[%s285] sm:$0x1]
      %v812 = vperm.slane %v810, 0
      %814 = vmatpush.msra.mxu0 %v809
      %815 = vmatpush.msra.mxu0 %v808
      %816 = vmatpush.msra.mxu0 %v807
      %817 = vmatpush.msra.mxu0 %v806
      %818 = vmatpush.msra.mxu0 %v805
      %819 = vmatpush.msra.mxu0 %v804
      %820 = vmatpush.msra.mxu0 %v803
      %821 = vmatpush.msra.mxu0 %v802
      %822 = vmatpush.msra.mxu0 %v801
      %823 = vmatpush.msra.mxu0 %v800
      %824 = vmatpush.msra.mxu0 %v799
      %825 = vmatpush.msra.mxu0 %v798
      %826 = vmatpush.msra.mxu0 %v797
      %827 = vmatpush.msra.mxu0 %v796
      %828 = vmatpush.msra.mxu0 %v795
      %829 = vmatpush.msra.mxu0 %v794
      %830 = vmatmul.f32.gmra.mxu0 %v709
      %v831 = vpop.f32.mrf.mxu0
      %v832 = vadd.f32 %v812, %v831
      %833 = vdwg.mxu0
      %v834 = vadd.f32 %v711, %v752
      %v835 = vxor.u32 %v834, 2147483648
      %v836 = vmul.f32 %v835, 1.442695
      %v837 = vpow.pop %v836
      %v838 = vadd.f32 %v837, 1.0
      %v839 = vrcp.pop %v838
      %v840 = vmul.f32 %v838, %v839
      %v841 = vsub.f32 1.0, %v840
      %v842 = vmul.f32 %v839, %v841
      %v843 = vadd.f32 %v839, %v842
      %vm844 = vweird.f32 %v838
      %vm845 = vweird.f32 %v839
      %vm846 = vmor %vm844, %vm845
      %v847 = vsel %vm846, %v839, %v843
      %v848 = vand.u32 2147483647, %v838
      %vm849 = vcmp.eq.f32.partialorder %v848, 8.507059e+37
      %v850 = vand.u32 %v838, 2147483648
      %v851 = vor.u32 1.1754944e-38, %v850
      %v852 = vsel %vm849, %v851, %v847
      %v853 = vmul.f32 1.0, %v852
      %v854 = vadd.f32 %v712, %v792
      %v855 = vxor.u32 %v854, 2147483648
      %v856 = vmul.f32 %v855, 1.442695
      %v857 = vpow.pop %v856
      %v858 = vadd.f32 %v857, 1.0
      %v859 = vrcp.pop %v858
      %v860 = vmul.f32 %v858, %v859
      %v861 = vsub.f32 1.0, %v860
      %v862 = vmul.f32 %v859, %v861
      %v863 = vadd.f32 %v859, %v862
      %vm864 = vweird.f32 %v858
      %vm865 = vweird.f32 %v859
      %vm866 = vmor %vm864, %vm865
      %v867 = vsel %vm866, %v859, %v863
      %v868 = vand.u32 2147483647, %v858
      %vm869 = vcmp.eq.f32.partialorder %v868, 8.507059e+37
      %v870 = vand.u32 %v858, 2147483648
      %v871 = vor.u32 1.1754944e-38, %v870
      %v872 = vsel %vm869, %v871, %v867
      %v873 = vmul.f32 1.0, %v872
      %v874 = vmul.f32 %v853, %v832
      %v875 = vadd.f32 %v713, %v874
      %v876 = vtanh.pop %v875
      %v877 = vsub.f32 1.0, %v873
      %v878 = vmul.f32 %v877, %v876
      %v879 = vmul.f32 %v873, %v709
      %v880 = vadd.f32 %v878, %v879
      %881 = vst [vmem:[#allocation2] sm:$0xff] %v880
      %s882 = scalar_lea.vmem %s175, 24
      %883 = vst [vmem:[%s882] sm:$0xff] %v880
      %s884 = smul.u32 4, %s14
      %p885 = scmp.lt.s32.totalorder %s884, 7
      %s886 = scalar_select %p885, %s884, 7
      %s887 = smul.addr %s886, 8
      %s888 = scalar_lea.vmem %s3, %s887
      // Predicated region
      $region37: #{encoder_rnn_forward.1} parent=31 // pred_check
        %p889 = pneg %p100
      $region38: #{encoder_rnn_forward.1} parent=31 // pred_check_branch
        %891 = sbr.rel (%p889) target = $region40
      $region39: #{encoder_rnn_forward.1} parent=31 // pred_region
        %s892 = smul.u32 4, %s14
      $region40: #{encoder_rnn_forward.1} parent=31 // pred_fallthru
        _
    $region32: #{encoder_rnn_forward.1} parent=5 // pred_fallthru
      _
    %p893 = scmp.le.s32.totalorder 2, %s9
    // Predicated region
    $region41: #{encoder_rnn_forward.1} parent=5 // pred_check
      %p894 = pneg %p893
    $region42: #{encoder_rnn_forward.1} parent=5 // pred_check_branch
      %896 = sbr.rel (%p894) target = $region44
    $region43: #{encoder_rnn_forward.1} parent=5 // pred_region
      %s897 = ssub.s32 %s9, 2
      // Predicated region
      $region45: #{encoder_rnn_forward.1} parent=43 // pred_check
        %p898 = pneg %p106
      $region46: #{encoder_rnn_forward.1} parent=43 // pred_check_branch
        %900 = sbr.rel (%p898) target = $region48
      $region47: #{encoder_rnn_forward.1} parent=43 // pred_region
        %s901 = smul.u32 4, %s15
        %p902 = scmp.lt.s32.totalorder %s901, 7
        %s903 = scalar_select %p902, %s901, 7
        %s904 = smul.addr %s903, 8
        %s905 = scalar_lea.vmem %s3, %s904
      $region48: #{encoder_rnn_forward.1} parent=43 // pred_fallthru
        _
    $region44: #{encoder_rnn_forward.1} parent=5 // pred_fallthru
      _
  $region6: #{encoder_rnn_forward.1} parent=0 // loop_footer
    %s13 = sadd.s32 1, %s9
  $region7: #{encoder_rnn_forward.1} parent=0 // loop_footer_branch
    %8 = sbr.rel target = $region3
  $region8: #{encoder_rnn_forward.1} parent=0 // loop_exit
    _

</llo_original>
